<compile_context>
chip_gen: v7x
topology: tpu7x:2x2x1
jax: 0.10.0
libtpu: 0.0.40
codegen_flags: <defaults>
</compile_context>

<pallas_src>
import functools

import jax
import jax.numpy as jnp
from jax import lax
from jax.experimental import pallas as pl
from jax.experimental.pallas import tpu as pltpu

GEM_P = 3.0       # GeneralizedMeanPoolingP init value (treated as constant)
GEM_EPS = 1e-6
BN_EPS = 1e-5


def _cbrt_pos(x):
    # x > 0 guaranteed by the GeM clamp; same formula in kernel and reference.
    return jnp.exp(jnp.log(x) * (1.0 / GEM_P))


def _dualscale_kernel(x_ref, w3_ref, abias_ref, we_ref, ebias_ref, mask_ref,
                      attn_ref, sel_ref, pooled_ref, *, H, W):
    """One grid step processes BB batch images, all lane-dense (C, B*H*Pw).

    x_ref      : (BB, Cin, (H+3)*(W+2))  zero-padded, spatially flattened input
    w3_ref     : (Ca, 9*Cin)             conv3x3 (+conv1x1 centre tap, *BN scale)
    abias_ref  : (Ca, 1)                 folded BN bias
    we_ref     : (An*Dout, An*Cin)       block-diagonal fused embedding weight
    ebias_ref  : (An*Dout, 1)            folded embedding BN bias
    mask_ref   : (1, H*(W+2))            1.0 on valid "wide" columns, else 0.0
    """
    BB = x_ref.shape[0]
    Ca = attn_ref.shape[1]
    An = sel_ref.shape[1]
    P = W + 2                 # padded row width
    HP = H * P                # "wide" column count per image

    # ---- im2col on the flat padded image: every tap (dy,dx) is a contiguous
    # ---- lane slice starting at dy*P+dx (no window reshapes / strided copies)
    taps = []
    for dy in range(3):
        for dx in range(3):
            off = dy * P + dx
            cols = [x_ref[b, :, off:off + HP] for b in range(BB)]
            taps.append(cols[0] if BB == 1 else jnp.concatenate(cols, axis=1))
    patches = jnp.concatenate(taps, axis=0)      # (9*Cin, BB*HP)
    xc = taps[4]                                 # centre tap == raw features

    # ---- BasicConv2d: one MXU push (1x1 conv + BN scale pre-folded) ----
    acc = jnp.dot(w3_ref[...], patches, preferred_element_type=jnp.float32)
    attn = jnp.maximum(acc + abias_ref[...], 0.0)          # (Ca, BB*HP)

    # ---- channel softmax, unrolled over the Ca rows (pure VPU) ----
    m = attn[0:1, :]
    for c in range(1, Ca):
        m = jnp.maximum(m, attn[c:c + 1, :])
    exps = [jnp.exp(attn[c:c + 1, :] - m) for c in range(Ca)]
    denom = exps[0]
    for c in range(1, Ca):
        denom = denom + exps[c]
    sel = jnp.concatenate(exps[:An], axis=0) / denom        # (An, BB*HP)

    # ---- Bap: both embeddings fused into one block-diagonal MXU push ----
    aif = jnp.concatenate([xc * sel[i:i + 1, :] for i in range(An)], axis=0)
    emb = jnp.dot(we_ref[...], aif, preferred_element_type=jnp.float32)
    emb = emb + ebias_ref[...]                              # (An*Dout, BB*HP)
    cpos = jnp.maximum(emb, GEM_EPS)
    c3 = cpos * cpos * cpos

    # ---- per-image writeback + masked GeM pooling ----
    inv_hw = 1.0 / float(H * W)
    for b in range(BB):
        s = b * HP
        attn_ref[b] = attn[:, s:s + HP].astype(attn_ref.dtype)
        sel_ref[b] = sel[:, s:s + HP].astype(sel_ref.dtype)
        mp = jnp.sum(c3[:, s:s + HP] * mask_ref[...], axis=1,
                     keepdims=True) * inv_hw                # (An*Dout, 1)
        pooled_ref[b] = _cbrt_pos(mp).astype(pooled_ref.dtype)


def dualscale_attention_forward(x_nchw, params, attention_num=2,
                                batch_block=None):
    """Returns (attentions, selected_attentions, bap_AiF_features, bap_features)."""
    w1, w3, ascale, abias, we, escale, ebias = params
    x = x_nchw.astype(jnp.float32)                # NCHW: channels already leading
    B, Cin, H, W = x.shape
    An = attention_num
    Ca = attention_num + 1
    Dout = we.shape[-1]
    P = W + 2
    HP = H * P

    if batch_block is None:
        batch_block = B if B <= 4 else 1          # fold small batches into one step
    assert B % batch_block == 0, "batch_block must divide B"
    BB = batch_block

    # ---- one-time constant folding (outside the kernel) ----
    # conv1x1 folded into the 3x3 centre tap; BN scale folded into the weights.
    w3f = w3.astype(jnp.float32).at[1, 1].add(w1.astype(jnp.float32))
    w3f = w3f * ascale.reshape(1, 1, 1, Ca)
    w3f = jnp.transpose(w3f, (3, 0, 1, 2)).reshape(Ca, 9 * Cin)     # (Ca, 9*Cin)
    abias_k = abias.reshape(Ca, 1).astype(jnp.float32)
    # block-diagonal fused embedding weight (BN scale folded): (An*Dout, An*Cin)
    we_s = (we * escale).astype(jnp.float32)                        # (An, Cin, Dout)
    we_bd = jnp.zeros((An * Dout, An * Cin), jnp.float32)
    for i in range(An):
        we_bd = we_bd.at[i * Dout:(i + 1) * Dout,
                         i * Cin:(i + 1) * Cin].set(we_s[i].T)
    ebias_k = ebias.reshape(An * Dout, 1).astype(jnp.float32)
    # valid-column mask for the "wide" im2col layout (col % (W+2) < W)
    mask = ((jnp.arange(HP) % P) < W).astype(jnp.float32).reshape(1, HP)

    # zero-pad spatially (1 top / 2 bottom / 1 left / 1 right) and flatten the
    # spatial dims so every conv tap becomes a contiguous lane slice in-kernel.
    # TODO(synk): at large H*W this pad could move inside the kernel
    # (memset VMEM scratch + interior DMA) to save one HBM pass.
    xpad = jnp.pad(x, ((0, 0), (0, 0), (1, 2), (1, 1)))
    xflat = xpad.reshape(B, Cin, (H + 3) * P)

    out_shapes = (
        jax.ShapeDtypeStruct((B, Ca, HP), jnp.float32),
        jax.ShapeDtypeStruct((B, An, HP), jnp.float32),
        jax.ShapeDtypeStruct((B, An * Dout, 1), jnp.float32),
    )
    in_specs = [
        pl.BlockSpec((BB, Cin, (H + 3) * P), lambda g: (g, 0, 0)),
        pl.BlockSpec((Ca, 9 * Cin), lambda g: (0, 0)),
        pl.BlockSpec((Ca, 1), lambda g: (0, 0)),
        pl.BlockSpec((An * Dout, An * Cin), lambda g: (0, 0)),
        pl.BlockSpec((An * Dout, 1), lambda g: (0, 0)),
        pl.BlockSpec((1, HP), lambda g: (0, 0)),
    ]
    out_specs = [
        pl.BlockSpec((BB, Ca, HP), lambda g: (g, 0, 0)),
        pl.BlockSpec((BB, An, HP), lambda g: (g, 0, 0)),
        pl.BlockSpec((BB, An * Dout, 1), lambda g: (g, 0, 0)),
    ]

    attn_w, sel_w, pooled = pl.pallas_call(
        functools.partial(_dualscale_kernel, H=H, W=W),
        out_shape=out_shapes,
        grid=(B // BB,),
        in_specs=in_specs,
        out_specs=out_specs,
        compiler_params=pltpu.CompilerParams(
            dimension_semantics=("parallel",)),   # batch steps are independent
    )(xflat, w3f, abias_k, we_bd, ebias_k, mask)

    # drop the 2 garbage columns per row introduced by the wide im2col layout
    attentions = attn_w.reshape(B, Ca, H, P)[:, :, :, :W]     # NCHW
    selected = sel_w.reshape(B, An, H, P)[:, :, :, :W]        # NCHW
    pooled = pooled.reshape(B, An, Dout)
    bap_AiF_features = [pooled[:, i, :] for i in range(An)]
    bap_features = jax.nn.relu(pooled.reshape(B, An * Dout))
    return attentions, selected, bap_AiF_features, bap_features


def _reference_forward(x_nchw, params, attention_num=2):
    """Pure-JAX reference (eval-mode, unfolded params), for correctness checking."""
    w1, w3, ascale, abias, we, escale, ebias = params
    x = jnp.transpose(x_nchw, (0, 2, 3, 1)).astype(jnp.float32)
    An = attention_num
    y1 = jnp.einsum('bhwc,cd->bhwd', x, w1, precision=lax.Precision.HIGHEST)
    y3 = lax.conv_general_dilated(x, w3, window_strides=(1, 1),
                                  padding=((1, 1), (1, 1)),
                                  dimension_numbers=('NHWC', 'HWIO', 'NHWC'),
                                  precision=lax.Precision.HIGHEST)
    attn = jnp.maximum((y1 + y3) * ascale.reshape(1, 1, 1, -1)
                       + abias.reshape(1, 1, 1, -1), 0.0)
    sm = jax.nn.softmax(attn, axis=-1)
    sel = sm[..., :An]
    pooled_list = []
    for i in range(An):
        aif = x * sel[..., i:i + 1]
        emb = jnp.einsum('bhwc,cd->bhwd', aif, we[i],
                         precision=lax.Precision.HIGHEST)
        emb = emb * escale[i].reshape(1, 1, 1, -1) + ebias[i].reshape(1, 1, 1, -1)
        c = jnp.maximum(emb, GEM_EPS)
        pooled_list.append(_cbrt_pos(jnp.mean(c * c * c, axis=(1, 2))))
    pooled = jnp.stack(pooled_list, axis=1)
    return (jnp.transpose(attn, (0, 3, 1, 2)),
            jnp.transpose(sel, (0, 3, 1, 2)),
            pooled)


def make_params(key, input_dim, out_dim, attention_num):
    Ca = attention_num + 1
    k1, k2, k3 = jax.random.split(key, 3)
    # kaiming-style deterministic init (synthetic weights, not a checkpoint)
    w1 = jax.random.normal(k1, (input_dim, Ca), jnp.float32) * (2.0 / input_dim) ** 0.5
    w3 = jax.random.normal(k2, (3, 3, input_dim, Ca), jnp.float32) * (2.0 / (9 * input_dim)) ** 0.5
    we = jax.random.normal(k3, (attention_num, input_dim, out_dim), jnp.float32) * (2.0 / input_dim) ** 0.5
    # BatchNorm (eval mode, init gamma=1, beta=0, mean=0, var=1) folded to scale/bias
    bn_fold = 1.0 / jnp.sqrt(1.0 + BN_EPS)
    ascale = jnp.full((1, Ca), bn_fold, jnp.float32)
    abias = jnp.zeros((1, Ca), jnp.float32)
    escale = jnp.full((attention_num, 1, out_dim), bn_fold, jnp.float32)
    ebias = jnp.zeros((attention_num, 1, out_dim), jnp.float32)
    return (w1, w3, ascale, abias, we, escale, ebias)


if __name__ == "__main__":
    B, Cin, H, W = 2, 8, 16, 16
    out_dim = 16
    attention_num = 2

    key = jax.random.PRNGKey(0)
    kx, kp = jax.random.split(key)
    x = jax.random.normal(kx, (B, Cin, H, W), jnp.float32)   # NCHW, like torch
    params = make_params(kp, Cin, out_dim, attention_num)

    attn, sel, aif_feats, bap_feats = dualscale_attention_forward(
        x, params, attention_num)
    jax.block_until_ready((attn, sel, aif_feats, bap_feats))

    # sanity check against pure-JAX reference (unfolded params)
    r_attn, r_sel, r_pooled = _reference_forward(x, params, attention_num)
    r_bap = jax.nn.relu(r_pooled.reshape(B, attention_num * out_dim))
    assert jnp.allclose(attn, r_attn, rtol=1e-3, atol=1e-3)
    assert jnp.allclose(sel, r_sel, rtol=1e-3, atol=1e-3)
    for i in range(attention_num):
        assert jnp.allclose(aif_feats[i], r_pooled[:, i, :], rtol=1e-3, atol=1e-3)
    assert jnp.allclose(bap_feats, r_bap, rtol=1e-3, atol=1e-3)

    print("KERNEL_OK")
</pallas_src>

<mosaic_0001>
module attributes {stable_mosaic.version = 11 : i64} {
  func.func @_dualscale_kernel(%arg0: i32, %arg1: memref<2x8x342xf32, #tpu.memory_space<vmem>>, %arg2: memref<3x72xf32, #tpu.memory_space<vmem>>, %arg3: memref<3x1xf32, #tpu.memory_space<vmem>>, %arg4: memref<32x16xf32, #tpu.memory_space<vmem>>, %arg5: memref<32x1xf32, #tpu.memory_space<vmem>>, %arg6: memref<1x288xf32, #tpu.memory_space<vmem>>, %arg7: memref<2x3x288xf32, #tpu.memory_space<vmem>>, %arg8: memref<2x2x288xf32, #tpu.memory_space<vmem>>, %arg9: memref<2x32x1xf32, #tpu.memory_space<vmem>>) attributes {dimension_semantics = [#tpu.dimension_semantics<parallel>], iteration_bounds = array<i64: 1>, scalar_prefetch = 0 : i64, scratch_operands = 0 : i64, tpu.core_type = #tpu.core_type<tc>, window_params = [{transform_indices = @transform_0, window_bounds = array<i64: 2, 8, 342>}, {pipeline_mode = #tpu.pipeline_mode<synchronous>, transform_indices = @transform_1, window_bounds = array<i64: 3, 72>}, {pipeline_mode = #tpu.pipeline_mode<synchronous>, transform_indices = @transform_2, window_bounds = array<i64: 3, 1>}, {pipeline_mode = #tpu.pipeline_mode<synchronous>, transform_indices = @transform_3, window_bounds = array<i64: 32, 16>}, {pipeline_mode = #tpu.pipeline_mode<synchronous>, transform_indices = @transform_4, window_bounds = array<i64: 32, 1>}, {pipeline_mode = #tpu.pipeline_mode<synchronous>, transform_indices = @transform_5, window_bounds = array<i64: 1, 288>}, {transform_indices = @transform_6, window_bounds = array<i64: 2, 3, 288>}, {transform_indices = @transform_7, window_bounds = array<i64: 2, 2, 288>}, {transform_indices = @transform_8, window_bounds = array<i64: 2, 32, 1>}]} {
    %c0 = arith.constant 0 : index
    %c0_0 = arith.constant 0 : index
    %c0_1 = arith.constant 0 : index
    %0 = vector.load %arg1[%c0, %c0_0, %c0_1] : memref<2x8x342xf32, #tpu.memory_space<vmem>>, vector<1x8x288xf32>
    %1 = vector.shape_cast %0 : vector<1x8x288xf32> to vector<8x288xf32>
    %c1 = arith.constant 1 : index
    %c0_2 = arith.constant 0 : index
    %c0_3 = arith.constant 0 : index
    %2 = vector.load %arg1[%c1, %c0_2, %c0_3] : memref<2x8x342xf32, #tpu.memory_space<vmem>>, vector<1x8x288xf32>
    %3 = vector.shape_cast %2 : vector<1x8x288xf32> to vector<8x288xf32>
    %4 = tpu.concatenate %1, %3 in 1 : vector<8x288xf32>, vector<8x288xf32> -> vector<8x576xf32>
    %c0_4 = arith.constant 0 : index
    %c0_5 = arith.constant 0 : index
    %c1_6 = arith.constant 1 : index
    %5 = vector.load %arg1[%c0_4, %c0_5, %c1_6] : memref<2x8x342xf32, #tpu.memory_space<vmem>>, vector<1x8x288xf32>
    %6 = vector.shape_cast %5 : vector<1x8x288xf32> to vector<8x288xf32>
    %c1_7 = arith.constant 1 : index
    %c0_8 = arith.constant 0 : index
    %c1_9 = arith.constant 1 : index
    %7 = vector.load %arg1[%c1_7, %c0_8, %c1_9] : memref<2x8x342xf32, #tpu.memory_space<vmem>>, vector<1x8x288xf32>
    %8 = vector.shape_cast %7 : vector<1x8x288xf32> to vector<8x288xf32>
    %9 = tpu.concatenate %6, %8 in 1 : vector<8x288xf32>, vector<8x288xf32> -> vector<8x576xf32>
    %c0_10 = arith.constant 0 : index
    %c0_11 = arith.constant 0 : index
    %c2 = arith.constant 2 : index
    %10 = vector.load %arg1[%c0_10, %c0_11, %c2] : memref<2x8x342xf32, #tpu.memory_space<vmem>>, vector<1x8x288xf32>
    %11 = vector.shape_cast %10 : vector<1x8x288xf32> to vector<8x288xf32>
    %c1_12 = arith.constant 1 : index
    %c0_13 = arith.constant 0 : index
    %c2_14 = arith.constant 2 : index
    %12 = vector.load %arg1[%c1_12, %c0_13, %c2_14] : memref<2x8x342xf32, #tpu.memory_space<vmem>>, vector<1x8x288xf32>
    %13 = vector.shape_cast %12 : vector<1x8x288xf32> to vector<8x288xf32>
    %14 = tpu.concatenate %11, %13 in 1 : vector<8x288xf32>, vector<8x288xf32> -> vector<8x576xf32>
    %c0_15 = arith.constant 0 : index
    %c0_16 = arith.constant 0 : index
    %c18 = arith.constant 18 : index
    %15 = vector.load %arg1[%c0_15, %c0_16, %c18] : memref<2x8x342xf32, #tpu.memory_space<vmem>>, vector<1x8x288xf32>
    %16 = vector.shape_cast %15 : vector<1x8x288xf32> to vector<8x288xf32>
    %c1_17 = arith.constant 1 : index
    %c0_18 = arith.constant 0 : index
    %c18_19 = arith.constant 18 : index
    %17 = vector.load %arg1[%c1_17, %c0_18, %c18_19] : memref<2x8x342xf32, #tpu.memory_space<vmem>>, vector<1x8x288xf32>
    %18 = vector.shape_cast %17 : vector<1x8x288xf32> to vector<8x288xf32>
    %19 = tpu.concatenate %16, %18 in 1 : vector<8x288xf32>, vector<8x288xf32> -> vector<8x576xf32>
    %c0_20 = arith.constant 0 : index
    %c0_21 = arith.constant 0 : index
    %c19 = arith.constant 19 : index
    %20 = vector.load %arg1[%c0_20, %c0_21, %c19] : memref<2x8x342xf32, #tpu.memory_space<vmem>>, vector<1x8x288xf32>
    %21 = vector.shape_cast %20 : vector<1x8x288xf32> to vector<8x288xf32>
    %c1_22 = arith.constant 1 : index
    %c0_23 = arith.constant 0 : index
    %c19_24 = arith.constant 19 : index
    %22 = vector.load %arg1[%c1_22, %c0_23, %c19_24] : memref<2x8x342xf32, #tpu.memory_space<vmem>>, vector<1x8x288xf32>
    %23 = vector.shape_cast %22 : vector<1x8x288xf32> to vector<8x288xf32>
    %24 = tpu.concatenate %21, %23 in 1 : vector<8x288xf32>, vector<8x288xf32> -> vector<8x576xf32>
    %c0_25 = arith.constant 0 : index
    %c0_26 = arith.constant 0 : index
    %c20 = arith.constant 20 : index
    %25 = vector.load %arg1[%c0_25, %c0_26, %c20] : memref<2x8x342xf32, #tpu.memory_space<vmem>>, vector<1x8x288xf32>
    %26 = vector.shape_cast %25 : vector<1x8x288xf32> to vector<8x288xf32>
    %c1_27 = arith.constant 1 : index
    %c0_28 = arith.constant 0 : index
    %c20_29 = arith.constant 20 : index
    %27 = vector.load %arg1[%c1_27, %c0_28, %c20_29] : memref<2x8x342xf32, #tpu.memory_space<vmem>>, vector<1x8x288xf32>
    %28 = vector.shape_cast %27 : vector<1x8x288xf32> to vector<8x288xf32>
    %29 = tpu.concatenate %26, %28 in 1 : vector<8x288xf32>, vector<8x288xf32> -> vector<8x576xf32>
    %c0_30 = arith.constant 0 : index
    %c0_31 = arith.constant 0 : index
    %c36 = arith.constant 36 : index
    %30 = vector.load %arg1[%c0_30, %c0_31, %c36] : memref<2x8x342xf32, #tpu.memory_space<vmem>>, vector<1x8x288xf32>
    %31 = vector.shape_cast %30 : vector<1x8x288xf32> to vector<8x288xf32>
    %c1_32 = arith.constant 1 : index
    %c0_33 = arith.constant 0 : index
    %c36_34 = arith.constant 36 : index
    %32 = vector.load %arg1[%c1_32, %c0_33, %c36_34] : memref<2x8x342xf32, #tpu.memory_space<vmem>>, vector<1x8x288xf32>
    %33 = vector.shape_cast %32 : vector<1x8x288xf32> to vector<8x288xf32>
    %34 = tpu.concatenate %31, %33 in 1 : vector<8x288xf32>, vector<8x288xf32> -> vector<8x576xf32>
    %c0_35 = arith.constant 0 : index
    %c0_36 = arith.constant 0 : index
    %c37 = arith.constant 37 : index
    %35 = vector.load %arg1[%c0_35, %c0_36, %c37] : memref<2x8x342xf32, #tpu.memory_space<vmem>>, vector<1x8x288xf32>
    %36 = vector.shape_cast %35 : vector<1x8x288xf32> to vector<8x288xf32>
    %c1_37 = arith.constant 1 : index
    %c0_38 = arith.constant 0 : index
    %c37_39 = arith.constant 37 : index
    %37 = vector.load %arg1[%c1_37, %c0_38, %c37_39] : memref<2x8x342xf32, #tpu.memory_space<vmem>>, vector<1x8x288xf32>
    %38 = vector.shape_cast %37 : vector<1x8x288xf32> to vector<8x288xf32>
    %39 = tpu.concatenate %36, %38 in 1 : vector<8x288xf32>, vector<8x288xf32> -> vector<8x576xf32>
    %c0_40 = arith.constant 0 : index
    %c0_41 = arith.constant 0 : index
    %c38 = arith.constant 38 : index
    %40 = vector.load %arg1[%c0_40, %c0_41, %c38] : memref<2x8x342xf32, #tpu.memory_space<vmem>>, vector<1x8x288xf32>
    %41 = vector.shape_cast %40 : vector<1x8x288xf32> to vector<8x288xf32>
    %c1_42 = arith.constant 1 : index
    %c0_43 = arith.constant 0 : index
    %c38_44 = arith.constant 38 : index
    %42 = vector.load %arg1[%c1_42, %c0_43, %c38_44] : memref<2x8x342xf32, #tpu.memory_space<vmem>>, vector<1x8x288xf32>
    %43 = vector.shape_cast %42 : vector<1x8x288xf32> to vector<8x288xf32>
    %44 = tpu.concatenate %41, %43 in 1 : vector<8x288xf32>, vector<8x288xf32> -> vector<8x576xf32>
    %45 = tpu.concatenate %4, %9, %14, %19, %24, %29, %34, %39, %44 in 0 : vector<8x576xf32>, vector<8x576xf32>, vector<8x576xf32>, vector<8x576xf32>, vector<8x576xf32>, vector<8x576xf32>, vector<8x576xf32>, vector<8x576xf32>, vector<8x576xf32> -> vector<72x576xf32>
    %c0_45 = arith.constant 0 : index
    %c0_46 = arith.constant 0 : index
    %46 = vector.load %arg2[%c0_45, %c0_46] : memref<3x72xf32, #tpu.memory_space<vmem>>, vector<3x72xf32>
    %cst = arith.constant dense<0.000000e+00> : vector<3x576xf32>
    %47 = tpu.matmul %46, %45, %cst {dimension_numbers = #tpu.dot_dimension_numbers<[1], [0], [0], [1], [0, 0, 1, 1], [], []>} : vector<3x72xf32>, vector<72x576xf32>, vector<3x576xf32> -> vector<3x576xf32>
    %c0_47 = arith.constant 0 : index
    %c0_48 = arith.constant 0 : index
    %48 = vector.load %arg3[%c0_47, %c0_48] : memref<3x1xf32, #tpu.memory_space<vmem>>, vector<3x1xf32>
    %49 = vector.broadcast %48 : vector<3x1xf32> to vector<3x576xf32>
    %50 = arith.addf %47, %49 : vector<3x576xf32>
    %cst_49 = arith.constant 0.000000e+00 : f32
    %51 = vector.broadcast %cst_49 : f32 to vector<3x576xf32>
    %52 = arith.maximumf %50, %51 : vector<3x576xf32>
    %53 = vector.extract_strided_slice %52 {offsets = [0, 0], sizes = [1, 576], strides = [1, 1]} : vector<3x576xf32> to vector<1x576xf32>
    %54 = vector.extract_strided_slice %52 {offsets = [1, 0], sizes = [1, 576], strides = [1, 1]} : vector<3x576xf32> to vector<1x576xf32>
    %55 = arith.maximumf %53, %54 : vector<1x576xf32>
    %56 = vector.extract_strided_slice %52 {offsets = [2, 0], sizes = [1, 576], strides = [1, 1]} : vector<3x576xf32> to vector<1x576xf32>
    %57 = arith.maximumf %55, %56 : vector<1x576xf32>
    %58 = vector.extract_strided_slice %52 {offsets = [0, 0], sizes = [1, 576], strides = [1, 1]} : vector<3x576xf32> to vector<1x576xf32>
    %59 = arith.subf %58, %57 : vector<1x576xf32>
    %60 = math.exp %59 : vector<1x576xf32>
    %61 = vector.extract_strided_slice %52 {offsets = [1, 0], sizes = [1, 576], strides = [1, 1]} : vector<3x576xf32> to vector<1x576xf32>
    %62 = arith.subf %61, %57 : vector<1x576xf32>
    %63 = math.exp %62 : vector<1x576xf32>
    %64 = vector.extract_strided_slice %52 {offsets = [2, 0], sizes = [1, 576], strides = [1, 1]} : vector<3x576xf32> to vector<1x576xf32>
    %65 = arith.subf %64, %57 : vector<1x576xf32>
    %66 = math.exp %65 : vector<1x576xf32>
    %67 = arith.addf %60, %63 : vector<1x576xf32>
    %68 = arith.addf %67, %66 : vector<1x576xf32>
    %69 = tpu.concatenate %60, %63 in 0 : vector<1x576xf32>, vector<1x576xf32> -> vector<2x576xf32>
    %70 = vector.broadcast %68 : vector<1x576xf32> to vector<2x576xf32>
    %71 = arith.divf %69, %70 : vector<2x576xf32>
    %72 = vector.extract_strided_slice %71 {offsets = [0, 0], sizes = [1, 576], strides = [1, 1]} : vector<2x576xf32> to vector<1x576xf32>
    %73 = vector.broadcast %72 : vector<1x576xf32> to vector<8x576xf32>
    %74 = arith.mulf %24, %73 : vector<8x576xf32>
    %75 = vector.extract_strided_slice %71 {offsets = [1, 0], sizes = [1, 576], strides = [1, 1]} : vector<2x576xf32> to vector<1x576xf32>
    %76 = vector.broadcast %75 : vector<1x576xf32> to vector<8x576xf32>
    %77 = arith.mulf %24, %76 : vector<8x576xf32>
    %78 = tpu.concatenate %74, %77 in 0 : vector<8x576xf32>, vector<8x576xf32> -> vector<16x576xf32>
    %c0_50 = arith.constant 0 : index
    %c0_51 = arith.constant 0 : index
    %79 = vector.load %arg4[%c0_50, %c0_51] : memref<32x16xf32, #tpu.memory_space<vmem>>, vector<32x16xf32>
    %cst_52 = arith.constant dense<0.000000e+00> : vector<32x576xf32>
    %80 = tpu.matmul %79, %78, %cst_52 {dimension_numbers = #tpu.dot_dimension_numbers<[1], [0], [0], [1], [0, 0, 1, 1], [], []>} : vector<32x16xf32>, vector<16x576xf32>, vector<32x576xf32> -> vector<32x576xf32>
    %c0_53 = arith.constant 0 : index
    %c0_54 = arith.constant 0 : index
    %81 = vector.load %arg5[%c0_53, %c0_54] : memref<32x1xf32, #tpu.memory_space<vmem>>, vector<32x1xf32>
    %82 = vector.broadcast %81 : vector<32x1xf32> to vector<32x576xf32>
    %83 = arith.addf %80, %82 : vector<32x576xf32>
    %cst_55 = arith.constant 9.99999997E-7 : f32
    %84 = vector.broadcast %cst_55 : f32 to vector<32x576xf32>
    %85 = arith.maximumf %83, %84 : vector<32x576xf32>
    %86 = arith.mulf %85, %85 : vector<32x576xf32>
    %87 = arith.mulf %86, %85 : vector<32x576xf32>
    %88 = vector.extract_strided_slice %52 {offsets = [0, 0], sizes = [3, 288], strides = [1, 1]} : vector<3x576xf32> to vector<3x288xf32>
    %c0_56 = arith.constant 0 : index
    %c0_57 = arith.constant 0 : index
    %c0_58 = arith.constant 0 : index
    %89 = vector.load %arg7[%c0_56, %c0_57, %c0_58] : memref<2x3x288xf32, #tpu.memory_space<vmem>>, vector<1x3x288xf32>
    %90 = vector.shape_cast %89 : vector<1x3x288xf32> to vector<3x288xf32>
    %91 = vector.shape_cast %88 : vector<3x288xf32> to vector<1x3x288xf32>
    tpu.vector_store %arg7[%c0_56, %c0_57, %c0_58], %91 {strides = array<i32>} : memref<2x3x288xf32, #tpu.memory_space<vmem>>, vector<1x3x288xf32>,
    %92 = vector.extract_strided_slice %71 {offsets = [0, 0], sizes = [2, 288], strides = [1, 1]} : vector<2x576xf32> to vector<2x288xf32>
    %c0_59 = arith.constant 0 : index
    %c0_60 = arith.constant 0 : index
    %c0_61 = arith.constant 0 : index
    %93 = vector.load %arg8[%c0_59, %c0_60, %c0_61] : memref<2x2x288xf32, #tpu.memory_space<vmem>>, vector<1x2x288xf32>
    %94 = vector.shape_cast %93 : vector<1x2x288xf32> to vector<2x288xf32>
    %95 = vector.shape_cast %92 : vector<2x288xf32> to vector<1x2x288xf32>
    tpu.vector_store %arg8[%c0_59, %c0_60, %c0_61], %95 {strides = array<i32>} : memref<2x2x288xf32, #tpu.memory_space<vmem>>, vector<1x2x288xf32>,
    %96 = vector.extract_strided_slice %87 {offsets = [0, 0], sizes = [32, 288], strides = [1, 1]} : vector<32x576xf32> to vector<32x288xf32>
    %c0_62 = arith.constant 0 : index
    %c0_63 = arith.constant 0 : index
    %97 = vector.load %arg6[%c0_62, %c0_63] : memref<1x288xf32, #tpu.memory_space<vmem>>, vector<1x288xf32>
    %98 = vector.broadcast %97 : vector<1x288xf32> to vector<32x288xf32>
    %99 = arith.mulf %96, %98 : vector<32x288xf32>
    %cst_64 = arith.constant dense<0.000000e+00> : vector<32xf32>
    %100 = vector.multi_reduction <add>, %99, %cst_64 [1] : vector<32x288xf32> to vector<32xf32>
    %101 = vector.shape_cast %100 : vector<32xf32> to vector<32x1xf32>
    %cst_65 = arith.constant 3.906250e-03 : f32
    %102 = vector.broadcast %cst_65 : f32 to vector<32x1xf32>
    %103 = arith.mulf %101, %102 : vector<32x1xf32>
    %104 = math.log %103 : vector<32x1xf32>
    %cst_66 = arith.constant 0.333333343 : f32
    %105 = vector.broadcast %cst_66 : f32 to vector<32x1xf32>
    %106 = arith.mulf %104, %105 : vector<32x1xf32>
    %107 = math.exp %106 : vector<32x1xf32>
    %c0_67 = arith.constant 0 : index
    %c0_68 = arith.constant 0 : index
    %c0_69 = arith.constant 0 : index
    %108 = vector.load %arg9[%c0_67, %c0_68, %c0_69] : memref<2x32x1xf32, #tpu.memory_space<vmem>>, vector<1x32x1xf32>
    %109 = vector.shape_cast %108 : vector<1x32x1xf32> to vector<32x1xf32>
    %110 = vector.shape_cast %107 : vector<32x1xf32> to vector<1x32x1xf32>
    tpu.vector_store %arg9[%c0_67, %c0_68, %c0_69], %110 {strides = array<i32>} : memref<2x32x1xf32, #tpu.memory_space<vmem>>, vector<1x32x1xf32>,
    %111 = vector.extract_strided_slice %52 {offsets = [0, 288], sizes = [3, 288], strides = [1, 1]} : vector<3x576xf32> to vector<3x288xf32>
    %c1_70 = arith.constant 1 : index
    %c0_71 = arith.constant 0 : index
    %c0_72 = arith.constant 0 : index
    %112 = vector.load %arg7[%c1_70, %c0_71, %c0_72] : memref<2x3x288xf32, #tpu.memory_space<vmem>>, vector<1x3x288xf32>
    %113 = vector.shape_cast %112 : vector<1x3x288xf32> to vector<3x288xf32>
    %114 = vector.shape_cast %111 : vector<3x288xf32> to vector<1x3x288xf32>
    tpu.vector_store %arg7[%c1_70, %c0_71, %c0_72], %114 {strides = array<i32>} : memref<2x3x288xf32, #tpu.memory_space<vmem>>, vector<1x3x288xf32>,
    %115 = vector.extract_strided_slice %71 {offsets = [0, 288], sizes = [2, 288], strides = [1, 1]} : vector<2x576xf32> to vector<2x288xf32>
    %c1_73 = arith.constant 1 : index
    %c0_74 = arith.constant 0 : index
    %c0_75 = arith.constant 0 : index
    %116 = vector.load %arg8[%c1_73, %c0_74, %c0_75] : memref<2x2x288xf32, #tpu.memory_space<vmem>>, vector<1x2x288xf32>
    %117 = vector.shape_cast %116 : vector<1x2x288xf32> to vector<2x288xf32>
    %118 = vector.shape_cast %115 : vector<2x288xf32> to vector<1x2x288xf32>
    tpu.vector_store %arg8[%c1_73, %c0_74, %c0_75], %118 {strides = array<i32>} : memref<2x2x288xf32, #tpu.memory_space<vmem>>, vector<1x2x288xf32>,
    %119 = vector.extract_strided_slice %87 {offsets = [0, 288], sizes = [32, 288], strides = [1, 1]} : vector<32x576xf32> to vector<32x288xf32>
    %c0_76 = arith.constant 0 : index
    %c0_77 = arith.constant 0 : index
    %120 = vector.load %arg6[%c0_76, %c0_77] : memref<1x288xf32, #tpu.memory_space<vmem>>, vector<1x288xf32>
    %121 = vector.broadcast %120 : vector<1x288xf32> to vector<32x288xf32>
    %122 = arith.mulf %119, %121 : vector<32x288xf32>
    %cst_78 = arith.constant dense<0.000000e+00> : vector<32xf32>
    %123 = vector.multi_reduction <add>, %122, %cst_78 [1] : vector<32x288xf32> to vector<32xf32>
    %124 = vector.shape_cast %123 : vector<32xf32> to vector<32x1xf32>
    %cst_79 = arith.constant 3.906250e-03 : f32
    %125 = vector.broadcast %cst_79 : f32 to vector<32x1xf32>
    %126 = arith.mulf %124, %125 : vector<32x1xf32>
    %127 = math.log %126 : vector<32x1xf32>
    %cst_80 = arith.constant 0.333333343 : f32
    %128 = vector.broadcast %cst_80 : f32 to vector<32x1xf32>
    %129 = arith.mulf %127, %128 : vector<32x1xf32>
    %130 = math.exp %129 : vector<32x1xf32>
    %c1_81 = arith.constant 1 : index
    %c0_82 = arith.constant 0 : index
    %c0_83 = arith.constant 0 : index
    %131 = vector.load %arg9[%c1_81, %c0_82, %c0_83] : memref<2x32x1xf32, #tpu.memory_space<vmem>>, vector<1x32x1xf32>
    %132 = vector.shape_cast %131 : vector<1x32x1xf32> to vector<32x1xf32>
    %133 = vector.shape_cast %130 : vector<32x1xf32> to vector<1x32x1xf32>
    tpu.vector_store %arg9[%c1_81, %c0_82, %c0_83], %133 {strides = array<i32>} : memref<2x32x1xf32, #tpu.memory_space<vmem>>, vector<1x32x1xf32>,
    return
  }
  func.func @transform_0(%arg0: i32) -> (i32, i32, i32) {
    %c0_i32 = arith.constant 0 : i32
    %c0_i32_0 = arith.constant 0 : i32
    %c0_i32_1 = arith.constant 0 : i32
    return %arg0, %c0_i32, %c0_i32_0 : i32, i32, i32
  }
  func.func @transform_1(%arg0: i32) -> (i32, i32) {
    %c0_i32 = arith.constant 0 : i32
    %c0_i32_0 = arith.constant 0 : i32
    %c0_i32_1 = arith.constant 0 : i32
    return %c0_i32, %c0_i32_0 : i32, i32
  }
  func.func @transform_2(%arg0: i32) -> (i32, i32) {
    %c0_i32 = arith.constant 0 : i32
    %c0_i32_0 = arith.constant 0 : i32
    %c0_i32_1 = arith.constant 0 : i32
    return %c0_i32, %c0_i32_0 : i32, i32
  }
  func.func @transform_3(%arg0: i32) -> (i32, i32) {
    %c0_i32 = arith.constant 0 : i32
    %c0_i32_0 = arith.constant 0 : i32
    %c0_i32_1 = arith.constant 0 : i32
    return %c0_i32, %c0_i32_0 : i32, i32
  }
  func.func @transform_4(%arg0: i32) -> (i32, i32) {
    %c0_i32 = arith.constant 0 : i32
    %c0_i32_0 = arith.constant 0 : i32
    %c0_i32_1 = arith.constant 0 : i32
    return %c0_i32, %c0_i32_0 : i32, i32
  }
  func.func @transform_5(%arg0: i32) -> (i32, i32) {
    %c0_i32 = arith.constant 0 : i32
    %c0_i32_0 = arith.constant 0 : i32
    %c0_i32_1 = arith.constant 0 : i32
    return %c0_i32, %c0_i32_0 : i32, i32
  }
  func.func @transform_6(%arg0: i32) -> (i32, i32, i32) {
    %c0_i32 = arith.constant 0 : i32
    %c0_i32_0 = arith.constant 0 : i32
    %c0_i32_1 = arith.constant 0 : i32
    return %arg0, %c0_i32, %c0_i32_0 : i32, i32, i32
  }
  func.func @transform_7(%arg0: i32) -> (i32, i32, i32) {
    %c0_i32 = arith.constant 0 : i32
    %c0_i32_0 = arith.constant 0 : i32
    %c0_i32_1 = arith.constant 0 : i32
    return %arg0, %c0_i32, %c0_i32_0 : i32, i32, i32
  }
  func.func @transform_8(%arg0: i32) -> (i32, i32, i32) {
    %c0_i32 = arith.constant 0 : i32
    %c0_i32_0 = arith.constant 0 : i32
    %c0_i32_1 = arith.constant 0 : i32
    return %arg0, %c0_i32, %c0_i32_0 : i32, i32, i32
  }
}

</mosaic_0001>

<llo_original>
// kernel: tpu_custom_call.1
$region0: #{tpu_custom_call.1}
  #allocation0 [shape = 'u32[]', space=smem, size = 0x4, offset = 0x4, fixed_abs, tag = 'smem constant byte address 0x4 - core index']
  #allocation1 [shape = 'u32[144,128]{1,0:T(1,128)}', space=vmem, size = 0x12000, scoped, tag = 'internal scratch']
  %s0 = inlined_call_operand.vmem [shape: f32[2,8,342], index: 0, kind: input, shape index: {}]
  %s1 = inlined_call_operand.vmem [shape: f32[3,72], index: 1, kind: input, shape index: {}]
  %s2 = inlined_call_operand.vmem [shape: f32[3,1], index: 2, kind: input, shape index: {}]
  %s3 = inlined_call_operand.vmem [shape: f32[32,16], index: 3, kind: input, shape index: {}]
  %s4 = inlined_call_operand.vmem [shape: f32[32,1], index: 4, kind: input, shape index: {}]
  %s5 = inlined_call_operand.vmem [shape: f32[1,288], index: 5, kind: input, shape index: {}]
  %s6 = inlined_call_operand.vmem [shape: f32[2,3,288], index: 6, kind: output, shape index: {0}]
  %s7 = inlined_call_operand.hbm [shape: f32[2,2,288], index: 7, kind: output, shape index: {1}]
  %s8 = inlined_call_operand.vmem [shape: f32[2,32,1], index: 8, kind: output, shape index: {2}]
  %9 = xla_tuple %s6, %s7, %s8
  %s10 = sld [smem:[#allocation0]]
  $region50: #{tpu_custom_call.1} parent=0
    _
  %s12 = ssub.s32 1, %s10
  %s13 = scalar_select 0, %s12, %s10
  $region1: #{tpu_custom_call.1} parent=0
    #allocation2 [shape = 'u8[6144]{0}', space=vmem, size = 0x1800, scoped, tag = 'output window, operand 1, single buffered']
    #allocation3 [shape = 's32[1]{0}', space=sflag, size = 0x4, scoped, tag = 'scoped memory for tpu_custom_call.1']
    %14 = vsyncpa [#allocation3], 0
    // Predicated region
    $region2: #{tpu_custom_call.1} parent=1 // pred_check
      _
    $region3: #{tpu_custom_call.1} parent=1 // pred_check_branch
      %16 = sbr.rel (0) target = $region5
    $region4: #{tpu_custom_call.1} parent=1 // pred_region
      _
    $region5: #{tpu_custom_call.1} parent=1 // pred_fallthru
      _
    // Predicated region
    $region6: #{tpu_custom_call.1} parent=1 // pred_check
      _
    $region7: #{tpu_custom_call.1} parent=1 // pred_check_branch
      %18 = sbr.rel (0) target = $region9
    $region8: #{tpu_custom_call.1} parent=1 // pred_region
      _
    $region9: #{tpu_custom_call.1} parent=1 // pred_fallthru
      _
    // Predicated region
    $region10: #{tpu_custom_call.1} parent=1 // pred_check
      _
    $region11: #{tpu_custom_call.1} parent=1 // pred_check_branch
      %20 = sbr.rel (0) target = $region13
    $region12: #{tpu_custom_call.1} parent=1 // pred_region
      _
    $region13: #{tpu_custom_call.1} parent=1 // pred_fallthru
      _
    // Predicated region
    $region14: #{tpu_custom_call.1} parent=1 // pred_check
      _
    $region15: #{tpu_custom_call.1} parent=1 // pred_check_branch
      %22 = sbr.rel (0) target = $region17
    $region16: #{tpu_custom_call.1} parent=1 // pred_region
      _
    $region17: #{tpu_custom_call.1} parent=1 // pred_fallthru
      _
    // Predicated region
    $region18: #{tpu_custom_call.1} parent=1 // pred_check
      _
    $region19: #{tpu_custom_call.1} parent=1 // pred_check_branch
      %24 = sbr.rel (0) target = $region21
    $region20: #{tpu_custom_call.1} parent=1 // pred_region
      _
    $region21: #{tpu_custom_call.1} parent=1 // pred_fallthru
      _
    // Predicated region
    $region22: #{tpu_custom_call.1} parent=1 // pred_check
      _
    $region23: #{tpu_custom_call.1} parent=1 // pred_check_branch
      %26 = sbr.rel (0) target = $region25
    $region24: #{tpu_custom_call.1} parent=1 // pred_region
      _
    $region25: #{tpu_custom_call.1} parent=1 // pred_fallthru
      _
    %v27 = vld [vmem:[%s0] sm:$0xff]
    %v28 = vld [vmem:[%s0 + $0x8] sm:$0xff]
    %v29 = vld [vmem:[%s0 + $0x10] sm:$0xff]
    %s30 = scalar_lea.vmem %s0, 24
    %v31 = vld [vmem:[%s30] sm:$0xff]
    %v32 = vld [vmem:[%s30 + $0x8] sm:$0xff]
    %v33 = vld [vmem:[%s30 + $0x10] sm:$0xff]
    %37 = vrot.lane.b32.xlu0 %v31, 32
    %v38 = vpop.permute.xlu0 %37
    %39 = vrot.lane.b32.xlu0 %v32, 32
    %v40 = vpop.permute.xlu0 %39
    %41 = vrot.lane.b32.xlu0 %v33, 32
    %v42 = vpop.permute.xlu0 %41
    %vm43 = vcmask 261120
    %v44 = vsel %vm43, %v38, %v40
    %v45 = vsel %vm43, %v40, %v42
    %v49 = vsel %vm43, %v29, %v38
    %53 = vrot.lane.b32.xlu0 %v27, 127
    %v54 = vpop.permute.xlu0 %53
    %55 = vrot.lane.b32.xlu0 %v28, 127
    %v56 = vpop.permute.xlu0 %55
    %57 = vrot.lane.b32.xlu0 %v29, 127
    %v58 = vpop.permute.xlu0 %57
    %vm59 = vcmask 1039360
    %v60 = vsel %vm59, %v54, %v56
    %v61 = vsel %vm59, %v56, %v58
    %65 = vrot.lane.b32.xlu0 %v31, 31
    %v66 = vpop.permute.xlu0 %65
    %67 = vrot.lane.b32.xlu0 %v32, 31
    %v68 = vpop.permute.xlu0 %67
    %69 = vrot.lane.b32.xlu0 %v33, 31
    %v70 = vpop.permute.xlu0 %69
    %vm71 = vcmask 252928
    %v72 = vsel %vm71, %v66, %v68
    %v73 = vsel %vm71, %v68, %v70
    %v77 = vsel %vm43, %v58, %v66
    %78 = vrot.lane.b32.xlu0 %v27, 126
    %v79 = vpop.permute.xlu0 %78
    %80 = vrot.lane.b32.xlu0 %v28, 126
    %v81 = vpop.permute.xlu0 %80
    %82 = vrot.lane.b32.xlu0 %v29, 126
    %v83 = vpop.permute.xlu0 %82
    %vm84 = vcmask 1031168
    %v85 = vsel %vm84, %v79, %v81
    %v86 = vsel %vm84, %v81, %v83
    %90 = vrot.lane.b32.xlu0 %v31, 30
    %v91 = vpop.permute.xlu0 %90
    %92 = vrot.lane.b32.xlu0 %v32, 30
    %v93 = vpop.permute.xlu0 %92
    %94 = vrot.lane.b32.xlu0 %v33, 30
    %v95 = vpop.permute.xlu0 %94
    %vm96 = vcmask 244736
    %v97 = vsel %vm96, %v91, %v93
    %v98 = vsel %vm96, %v93, %v95
    %v102 = vsel %vm43, %v83, %v91
    %103 = vrot.lane.b32.xlu0 %v27, 110
    %v104 = vpop.permute.xlu0 %103
    %105 = vrot.lane.b32.xlu0 %v28, 110
    %v106 = vpop.permute.xlu0 %105
    %107 = vrot.lane.b32.xlu0 %v29, 110
    %v108 = vpop.permute.xlu0 %107
    %vm109 = vcmask 900096
    %v110 = vsel %vm109, %v104, %v106
    %v111 = vsel %vm109, %v106, %v108
    %115 = vrot.lane.b32.xlu0 %v31, 14
    %v116 = vpop.permute.xlu0 %115
    %117 = vrot.lane.b32.xlu0 %v32, 14
    %v118 = vpop.permute.xlu0 %117
    %119 = vrot.lane.b32.xlu0 %v33, 14
    %v120 = vpop.permute.xlu0 %119
    %vm121 = vcmask 113664
    %v122 = vsel %vm121, %v116, %v118
    %v123 = vsel %vm121, %v118, %v120
    %v127 = vsel %vm43, %v108, %v116
    %128 = vrot.lane.b32.xlu0 %v27, 109
    %v129 = vpop.permute.xlu0 %128
    %130 = vrot.lane.b32.xlu0 %v28, 109
    %v131 = vpop.permute.xlu0 %130
    %132 = vrot.lane.b32.xlu0 %v29, 109
    %v133 = vpop.permute.xlu0 %132
    %vm134 = vcmask 891904
    %v135 = vsel %vm134, %v129, %v131
    %v136 = vsel %vm134, %v131, %v133
    %140 = vrot.lane.b32.xlu0 %v31, 13
    %v141 = vpop.permute.xlu0 %140
    %142 = vrot.lane.b32.xlu0 %v32, 13
    %v143 = vpop.permute.xlu0 %142
    %144 = vrot.lane.b32.xlu0 %v33, 13
    %v145 = vpop.permute.xlu0 %144
    %vm146 = vcmask 105472
    %v147 = vsel %vm146, %v141, %v143
    %v148 = vsel %vm146, %v143, %v145
    %v152 = vsel %vm43, %v133, %v141
    %153 = vrot.lane.b32.xlu0 %v27, 108
    %v154 = vpop.permute.xlu0 %153
    %155 = vrot.lane.b32.xlu0 %v28, 108
    %v156 = vpop.permute.xlu0 %155
    %157 = vrot.lane.b32.xlu0 %v29, 108
    %v158 = vpop.permute.xlu0 %157
    %vm159 = vcmask 883712
    %v160 = vsel %vm159, %v154, %v156
    %v161 = vsel %vm159, %v156, %v158
    %165 = vrot.lane.b32.xlu0 %v31, 12
    %v166 = vpop.permute.xlu0 %165
    %167 = vrot.lane.b32.xlu0 %v32, 12
    %v168 = vpop.permute.xlu0 %167
    %169 = vrot.lane.b32.xlu0 %v33, 12
    %v170 = vpop.permute.xlu0 %169
    %vm171 = vcmask 97280
    %v172 = vsel %vm171, %v166, %v168
    %v173 = vsel %vm171, %v168, %v170
    %v177 = vsel %vm43, %v158, %v166
    %178 = vrot.lane.b32.xlu0 %v27, 92
    %v179 = vpop.permute.xlu0 %178
    %180 = vrot.lane.b32.xlu0 %v28, 92
    %v181 = vpop.permute.xlu0 %180
    %182 = vrot.lane.b32.xlu0 %v29, 92
    %v183 = vpop.permute.xlu0 %182
    %vm184 = vcmask 752640
    %v185 = vsel %vm184, %v179, %v181
    %v186 = vsel %vm184, %v181, %v183
    %190 = vrot.lane.b32.xlu0 %v31, 124
    %v191 = vpop.permute.xlu0 %190
    %192 = vrot.lane.b32.xlu0 %v32, 124
    %v193 = vpop.permute.xlu0 %192
    %194 = vrot.lane.b32.xlu0 %v33, 124
    %v195 = vpop.permute.xlu0 %194
    %vm196 = vcmask 1014784
    %v197 = vsel %vm196, %v191, %v193
    %v198 = vsel %vm196, %v193, %v195
    %v202 = vsel %vm43, %v183, %v197
    %203 = vrot.lane.b32.xlu0 %v27, 91
    %v204 = vpop.permute.xlu0 %203
    %205 = vrot.lane.b32.xlu0 %v28, 91
    %v206 = vpop.permute.xlu0 %205
    %207 = vrot.lane.b32.xlu0 %v29, 91
    %v208 = vpop.permute.xlu0 %207
    %vm209 = vcmask 744448
    %v210 = vsel %vm209, %v204, %v206
    %v211 = vsel %vm209, %v206, %v208
    %215 = vrot.lane.b32.xlu0 %v31, 123
    %v216 = vpop.permute.xlu0 %215
    %217 = vrot.lane.b32.xlu0 %v32, 123
    %v218 = vpop.permute.xlu0 %217
    %219 = vrot.lane.b32.xlu0 %v33, 123
    %v220 = vpop.permute.xlu0 %219
    %vm221 = vcmask 1006592
    %v222 = vsel %vm221, %v216, %v218
    %v223 = vsel %vm221, %v218, %v220
    %v227 = vsel %vm43, %v208, %v222
    %228 = vrot.lane.b32.xlu0 %v27, 90
    %v229 = vpop.permute.xlu0 %228
    %230 = vrot.lane.b32.xlu0 %v28, 90
    %v231 = vpop.permute.xlu0 %230
    %232 = vrot.lane.b32.xlu0 %v29, 90
    %v233 = vpop.permute.xlu0 %232
    %vm234 = vcmask 736256
    %v235 = vsel %vm234, %v229, %v231
    %v236 = vsel %vm234, %v231, %v233
    %240 = vrot.lane.b32.xlu0 %v31, 122
    %v241 = vpop.permute.xlu0 %240
    %242 = vrot.lane.b32.xlu0 %v32, 122
    %v243 = vpop.permute.xlu0 %242
    %244 = vrot.lane.b32.xlu0 %v33, 122
    %v245 = vpop.permute.xlu0 %244
    %vm246 = vcmask 998400
    %v247 = vsel %vm246, %v241, %v243
    %v248 = vsel %vm246, %v243, %v245
    %v252 = vsel %vm43, %v233, %v247
    %v253 = vld [vmem:[%s1] sm:$0x7]
    %v254 = vld [vmem:[%s2] sm:$0x7]
    %256 = vset.pattern.permute.xlu0 0
    %257 = vperm.xlu0 %256, %v254
    %v258 = vpop.permute.xlu0 %257
    %vm260 = vcmask 588800
    %v262 = vsel %vm260, %v253, 0
    %264 = vmatprep.subr.mxu0 %v28
    %265 = vmatpush1.msra.mxu0 %v27
    %266 = vmatprep.subr.mxu0 %v61
    %267 = vmatpush1.msra.mxu0 %v60
    %268 = vmatprep.subr.mxu0 %v86
    %269 = vmatpush1.msra.mxu0 %v85
    %270 = vmatprep.subr.mxu0 %v111
    %271 = vmatpush1.msra.mxu0 %v110
    %272 = vmatprep.subr.mxu0 %v136
    %273 = vmatpush1.msra.mxu0 %v135
    %274 = vmatprep.subr.mxu0 %v161
    %275 = vmatpush1.msra.mxu0 %v160
    %276 = vmatprep.subr.mxu0 %v186
    %277 = vmatpush1.msra.mxu0 %v185
    %278 = vmatprep.subr.mxu0 %v211
    %279 = vmatpush1.msra.mxu0 %v210
    %280 = vmatprep.subr.mxu0 %v236
    %281 = vmatpush1.msra.mxu0 %v235
    %282 = vmatprep.subr.mxu0 0.0
    %283 = vmatpush1.msra.mxu0 0.0
    %284 = vmatprep.subr.mxu0 0.0
    %285 = vmatpush1.msra.mxu0 0.0
    %286 = vmatprep.subr.mxu0 0.0
    %287 = vmatpush1.msra.mxu0 0.0
    %288 = vmatprep.subr.mxu0 0.0
    %289 = vmatpush1.msra.mxu0 0.0
    %290 = vmatprep.subr.mxu0 0.0
    %291 = vmatpush1.msra.mxu0 0.0
    %292 = vmatprep.subr.mxu0 0.0
    %293 = vmatpush1.msra.mxu0 0.0
    %294 = vmatprep.subr.mxu0 0.0
    %295 = vmatpush1.msra.mxu0 0.0
    %296 = vmatprep.subr.mxu0 0.0
    %297 = vmatpush1.msra.mxu0 0.0
    %298 = vmatprep.subr.mxu0 0.0
    %299 = vmatpush1.msra.mxu0 0.0
    %300 = vmatprep.subr.mxu0 0.0
    %301 = vmatpush1.msra.mxu0 0.0
    %302 = vmatprep.subr.mxu0 0.0
    %303 = vmatpush1.msra.mxu0 0.0
    %304 = vmatprep.subr.mxu0 0.0
    %305 = vmatpush1.msra.mxu0 0.0
    %306 = vmatprep.subr.mxu0 0.0
    %307 = vmatpush1.msra.mxu0 0.0
    %308 = vmatprep.subr.mxu0 0.0
    %309 = vmatpush1.msra.mxu0 0.0
    %310 = vmatprep.subr.mxu0 0.0
    %311 = vmatpush1.msra.mxu0 0.0
    %312 = vmatprep.subr.mxu0 0.0
    %313 = vmatpush1.msra.mxu0 0.0
    %314 = vmatprep.subr.mxu0 0.0
    %315 = vmatpush1.msra.mxu0 0.0
    %316 = vmatprep.subr.mxu0 0.0
    %317 = vmatpush1.msra.mxu0 0.0
    %318 = vmatprep.subr.mxu0 0.0
    %319 = vmatpush1.msra.mxu0 0.0
    %320 = vmatprep.subr.mxu0 0.0
    %321 = vmatpush1.msra.mxu0 0.0
    %322 = vmatprep.subr.mxu0 0.0
    %323 = vmatpush1.msra.mxu0 0.0
    %324 = vmatprep.subr.mxu0 0.0
    %325 = vmatpush1.msra.mxu0 0.0
    %326 = vmatprep.subr.mxu0 0.0
    %327 = vmatpush1.msra.mxu0 0.0
    %328 = vmatprep.mubr.f32.mxu0 0.0
    %329 = vmatmul.mubr.f32.gmra.mrb[0].mxu0 %v262
    %v330 = vpop.f32.mrb[0].mxu0
    %v331 = vadd.f32 %v258, %v330
    %v332 = vpop.f32.mrb[0].mxu0
    %v333 = vadd.f32 %v258, %v332
    %334 = vdwg.mxu0
    %335 = vmatprep.subr.mxu0 %v44
    %336 = vmatpush1.msra.mxu0 %v49
    %337 = vmatprep.subr.mxu0 %v72
    %338 = vmatpush1.msra.mxu0 %v77
    %339 = vmatprep.subr.mxu0 %v97
    %340 = vmatpush1.msra.mxu0 %v102
    %341 = vmatprep.subr.mxu0 %v122
    %342 = vmatpush1.msra.mxu0 %v127
    %343 = vmatprep.subr.mxu0 %v147
    %344 = vmatpush1.msra.mxu0 %v152
    %345 = vmatprep.subr.mxu0 %v172
    %346 = vmatpush1.msra.mxu0 %v177
    %347 = vmatprep.subr.mxu0 %v198
    %348 = vmatpush1.msra.mxu0 %v202
    %349 = vmatprep.subr.mxu0 %v223
    %350 = vmatpush1.msra.mxu0 %v227
    %351 = vmatprep.subr.mxu0 %v248
    %352 = vmatpush1.msra.mxu0 %v252
    %353 = vmatprep.subr.mxu0 0.0
    %354 = vmatpush1.msra.mxu0 0.0
    %355 = vmatprep.subr.mxu0 0.0
    %356 = vmatpush1.msra.mxu0 0.0
    %357 = vmatprep.subr.mxu0 0.0
    %358 = vmatpush1.msra.mxu0 0.0
    %359 = vmatprep.subr.mxu0 0.0
    %360 = vmatpush1.msra.mxu0 0.0
    %361 = vmatprep.subr.mxu0 0.0
    %362 = vmatpush1.msra.mxu0 0.0
    %363 = vmatprep.subr.mxu0 0.0
    %364 = vmatpush1.msra.mxu0 0.0
    %365 = vmatprep.subr.mxu0 0.0
    %366 = vmatpush1.msra.mxu0 0.0
    %367 = vmatprep.subr.mxu0 0.0
    %368 = vmatpush1.msra.mxu0 0.0
    %369 = vmatprep.subr.mxu0 0.0
    %370 = vmatpush1.msra.mxu0 0.0
    %371 = vmatprep.subr.mxu0 0.0
    %372 = vmatpush1.msra.mxu0 0.0
    %373 = vmatprep.subr.mxu0 0.0
    %374 = vmatpush1.msra.mxu0 0.0
    %375 = vmatprep.subr.mxu0 0.0
    %376 = vmatpush1.msra.mxu0 0.0
    %377 = vmatprep.subr.mxu0 0.0
    %378 = vmatpush1.msra.mxu0 0.0
    %379 = vmatprep.subr.mxu0 0.0
    %380 = vmatpush1.msra.mxu0 0.0
    %381 = vmatprep.subr.mxu0 0.0
    %382 = vmatpush1.msra.mxu0 0.0
    %383 = vmatprep.subr.mxu0 0.0
    %384 = vmatpush1.msra.mxu0 0.0
    %385 = vmatprep.subr.mxu0 0.0
    %386 = vmatpush1.msra.mxu0 0.0
    %387 = vmatprep.subr.mxu0 0.0
    %388 = vmatpush1.msra.mxu0 0.0
    %389 = vmatprep.subr.mxu0 0.0
    %390 = vmatpush1.msra.mxu0 0.0
    %391 = vmatprep.subr.mxu0 0.0
    %392 = vmatpush1.msra.mxu0 0.0
    %393 = vmatprep.subr.mxu0 0.0
    %394 = vmatpush1.msra.mxu0 0.0
    %395 = vmatprep.subr.mxu0 0.0
    %396 = vmatpush1.msra.mxu0 0.0
    %397 = vmatprep.subr.mxu0 0.0
    %398 = vmatpush1.msra.mxu0 0.0
    %399 = vmatprep.mubr.f32.mxu0 0.0
    %400 = vmatmul.mubr.f32.gmra.mrb[0].mxu0 %v262
    %v401 = vpop.f32.mrb[0].mxu0
    %v402 = vadd.f32 %v258, %v401
    %v403 = vpop.f32.mrb[0].mxu0
    %v404 = vadd.f32 %v258, %v403
    %405 = vdwg.mxu0
    %406 = vmatprep.subr.mxu0 0.0
    %407 = vmatpush1.msra.mxu0 %v45
    %408 = vmatprep.subr.mxu0 0.0
    %409 = vmatpush1.msra.mxu0 %v73
    %410 = vmatprep.subr.mxu0 0.0
    %411 = vmatpush1.msra.mxu0 %v98
    %412 = vmatprep.subr.mxu0 0.0
    %413 = vmatpush1.msra.mxu0 %v123
    %414 = vmatprep.subr.mxu0 0.0
    %415 = vmatpush1.msra.mxu0 %v148
    %416 = vmatprep.subr.mxu0 0.0
    %417 = vmatpush1.msra.mxu0 %v173
    %418 = vmatprep.subr.mxu0 0.0
    %419 = vmatpush1.msra.mxu0 %v195
    %420 = vmatprep.subr.mxu0 0.0
    %421 = vmatpush1.msra.mxu0 %v220
    %422 = vmatprep.subr.mxu0 0.0
    %423 = vmatpush1.msra.mxu0 %v245
    %424 = vmatprep.subr.mxu0 0.0
    %425 = vmatpush1.msra.mxu0 0.0
    %426 = vmatprep.subr.mxu0 0.0
    %427 = vmatpush1.msra.mxu0 0.0
    %428 = vmatprep.subr.mxu0 0.0
    %429 = vmatpush1.msra.mxu0 0.0
    %430 = vmatprep.subr.mxu0 0.0
    %431 = vmatpush1.msra.mxu0 0.0
    %432 = vmatprep.subr.mxu0 0.0
    %433 = vmatpush1.msra.mxu0 0.0
    %434 = vmatprep.subr.mxu0 0.0
    %435 = vmatpush1.msra.mxu0 0.0
    %436 = vmatprep.subr.mxu0 0.0
    %437 = vmatpush1.msra.mxu0 0.0
    %438 = vmatprep.subr.mxu0 0.0
    %439 = vmatpush1.msra.mxu0 0.0
    %440 = vmatprep.subr.mxu0 0.0
    %441 = vmatpush1.msra.mxu0 0.0
    %442 = vmatprep.subr.mxu0 0.0
    %443 = vmatpush1.msra.mxu0 0.0
    %444 = vmatprep.subr.mxu0 0.0
    %445 = vmatpush1.msra.mxu0 0.0
    %446 = vmatprep.subr.mxu0 0.0
    %447 = vmatpush1.msra.mxu0 0.0
    %448 = vmatprep.subr.mxu0 0.0
    %449 = vmatpush1.msra.mxu0 0.0
    %450 = vmatprep.subr.mxu0 0.0
    %451 = vmatpush1.msra.mxu0 0.0
    %452 = vmatprep.subr.mxu0 0.0
    %453 = vmatpush1.msra.mxu0 0.0
    %454 = vmatprep.subr.mxu0 0.0
    %455 = vmatpush1.msra.mxu0 0.0
    %456 = vmatprep.subr.mxu0 0.0
    %457 = vmatpush1.msra.mxu0 0.0
    %458 = vmatprep.subr.mxu0 0.0
    %459 = vmatpush1.msra.mxu0 0.0
    %460 = vmatprep.subr.mxu0 0.0
    %461 = vmatpush1.msra.mxu0 0.0
    %462 = vmatprep.subr.mxu0 0.0
    %463 = vmatpush1.msra.mxu0 0.0
    %464 = vmatprep.subr.mxu0 0.0
    %465 = vmatpush1.msra.mxu0 0.0
    %466 = vmatprep.subr.mxu0 0.0
    %467 = vmatpush1.msra.mxu0 0.0
    %468 = vmatprep.subr.mxu0 0.0
    %469 = vmatpush1.msra.mxu0 0.0
    %470 = vmatprep.mubr.f32.mxu0 0.0
    %471 = vmatmul.mubr.f32.gmra.mrb[0].mxu0 %v262
    %v472 = vpop.f32.mrb[0].mxu0
    %v473 = vadd.f32 %v258, %v472
    %v474 = vpop.f32.mrb[0].mxu0
    %475 = vdwg.mxu0
    %v476 = vmax.f32 %v331, 0.0
    %v477 = vmax.f32 %v333, 0.0
    %v478 = vmax.f32 %v402, 0.0
    %v479 = vmax.f32 %v404, 0.0
    %v480 = vmax.f32 %v473, 0.0
    %v486 = vrot.slane %v476, 1
    %v487 = vrot.slane %v477, 1
    %v488 = vrot.slane %v478, 1
    %v489 = vrot.slane %v479, 1
    %v490 = vrot.slane %v480, 1
    %v496 = vmax.f32 %v476, %v486
    %v497 = vmax.f32 %v477, %v487
    %v498 = vmax.f32 %v478, %v488
    %v499 = vmax.f32 %v479, %v489
    %v500 = vmax.f32 %v480, %v490
    %v501 = vrot.slane %v476, 2
    %v502 = vrot.slane %v477, 2
    %v503 = vrot.slane %v478, 2
    %v504 = vrot.slane %v479, 2
    %v505 = vrot.slane %v480, 2
    %v511 = vmax.f32 %v496, %v501
    %v512 = vmax.f32 %v497, %v502
    %v513 = vmax.f32 %v498, %v503
    %v514 = vmax.f32 %v499, %v504
    %v515 = vmax.f32 %v500, %v505
    %v516 = vsub.f32 %v476, %v511
    %v517 = vsub.f32 %v477, %v512
    %v518 = vsub.f32 %v478, %v513
    %v519 = vsub.f32 %v479, %v514
    %v520 = vsub.f32 %v480, %v515
    %v521 = vmul.f32 %v516, 1.442695
    %v522 = vpow.pop %v521
    %v523 = vmul.f32 %v517, 1.442695
    %v524 = vpow.pop %v523
    %v525 = vmul.f32 %v518, 1.442695
    %v526 = vpow.pop %v525
    %v527 = vmul.f32 %v519, 1.442695
    %v528 = vpow.pop %v527
    %v529 = vmul.f32 %v520, 1.442695
    %v530 = vpow.pop %v529
    %v536 = vrot.slane %v511, 7
    %v537 = vrot.slane %v512, 7
    %v538 = vrot.slane %v513, 7
    %v539 = vrot.slane %v514, 7
    %v540 = vrot.slane %v515, 7
    %v546 = vsub.f32 %v476, %v536
    %v547 = vsub.f32 %v477, %v537
    %v548 = vsub.f32 %v478, %v538
    %v549 = vsub.f32 %v479, %v539
    %v550 = vsub.f32 %v480, %v540
    %v551 = vmul.f32 %v546, 1.442695
    %v552 = vpow.pop %v551
    %v553 = vmul.f32 %v547, 1.442695
    %v554 = vpow.pop %v553
    %v555 = vmul.f32 %v548, 1.442695
    %v556 = vpow.pop %v555
    %v557 = vmul.f32 %v549, 1.442695
    %v558 = vpow.pop %v557
    %v559 = vmul.f32 %v550, 1.442695
    %v560 = vpow.pop %v559
    %v561 = vrot.slane %v511, 6
    %v562 = vrot.slane %v512, 6
    %v563 = vrot.slane %v513, 6
    %v564 = vrot.slane %v514, 6
    %v565 = vrot.slane %v515, 6
    %v571 = vsub.f32 %v476, %v561
    %v572 = vsub.f32 %v477, %v562
    %v573 = vsub.f32 %v478, %v563
    %v574 = vsub.f32 %v479, %v564
    %v575 = vsub.f32 %v480, %v565
    %v576 = vmul.f32 %v571, 1.442695
    %v577 = vpow.pop %v576
    %v578 = vmul.f32 %v572, 1.442695
    %v579 = vpow.pop %v578
    %v580 = vmul.f32 %v573, 1.442695
    %v581 = vpow.pop %v580
    %v582 = vmul.f32 %v574, 1.442695
    %v583 = vpow.pop %v582
    %v584 = vmul.f32 %v575, 1.442695
    %v585 = vpow.pop %v584
    %v591 = vrot.slane %v552, 1
    %v592 = vrot.slane %v554, 1
    %v593 = vrot.slane %v556, 1
    %v594 = vrot.slane %v558, 1
    %v595 = vrot.slane %v560, 1
    %v601 = vadd.f32 %v522, %v591
    %v602 = vadd.f32 %v524, %v592
    %v603 = vadd.f32 %v526, %v593
    %v604 = vadd.f32 %v528, %v594
    %v605 = vadd.f32 %v530, %v595
    %v611 = vrot.slane %v577, 2
    %v612 = vrot.slane %v579, 2
    %v613 = vrot.slane %v581, 2
    %v614 = vrot.slane %v583, 2
    %v615 = vrot.slane %v585, 2
    %v621 = vadd.f32 %v601, %v611
    %v622 = vadd.f32 %v602, %v612
    %v623 = vadd.f32 %v603, %v613
    %v624 = vadd.f32 %v604, %v614
    %v625 = vadd.f32 %v605, %v615
    %vm626 = vcmask 1040384
    %v627 = vsel %vm626, %v522, %v552
    %v628 = vsel %vm626, %v524, %v554
    %v629 = vsel %vm626, %v526, %v556
    %v630 = vsel %vm626, %v528, %v558
    %v631 = vsel %vm626, %v530, %v560
    %v632 = vlaneseq
    %v633 = vshrl.u32 %v632, 7
    %v634 = vsub.s32 0, %v633
    %v635 = vrot.slane %v621, %v634
    %v636 = vlaneseq
    %v637 = vshrl.u32 %v636, 7
    %v638 = vsub.s32 0, %v637
    %v639 = vrot.slane %v622, %v638
    %v640 = vlaneseq
    %v641 = vshrl.u32 %v640, 7
    %v642 = vsub.s32 0, %v641
    %v643 = vrot.slane %v623, %v642
    %v644 = vlaneseq
    %v645 = vshrl.u32 %v644, 7
    %v646 = vsub.s32 0, %v645
    %v647 = vrot.slane %v624, %v646
    %v648 = vlaneseq
    %v649 = vshrl.u32 %v648, 7
    %v650 = vsub.s32 0, %v649
    %v651 = vrot.slane %v625, %v650
    %v652 = vrcp.pop %v635
    %v653 = vmul.f32 %v627, %v652
    %v654 = vrcp.pop %v639
    %v655 = vmul.f32 %v628, %v654
    %v656 = vrcp.pop %v643
    %v657 = vmul.f32 %v629, %v656
    %v658 = vrcp.pop %v647
    %v659 = vmul.f32 %v630, %v658
    %v660 = vrcp.pop %v651
    %v661 = vmul.f32 %v631, %v660
    %v662 = vlaneseq
    %v663 = vshrl.u32 %v662, 7
    %v664 = vsub.s32 0, %v663
    %v665 = vrot.slane %v653, %v664
    %v666 = vlaneseq
    %v667 = vshrl.u32 %v666, 7
    %v668 = vsub.s32 0, %v667
    %v669 = vrot.slane %v655, %v668
    %v670 = vlaneseq
    %v671 = vshrl.u32 %v670, 7
    %v672 = vsub.s32 0, %v671
    %v673 = vrot.slane %v657, %v672
    %v674 = vlaneseq
    %v675 = vshrl.u32 %v674, 7
    %v676 = vsub.s32 0, %v675
    %v677 = vrot.slane %v659, %v676
    %v678 = vlaneseq
    %v679 = vshrl.u32 %v678, 7
    %v680 = vsub.s32 0, %v679
    %v681 = vrot.slane %v661, %v680
    %v682 = vmul.f32 %v135, %v665
    %v683 = vmul.f32 %v136, %v669
    %v684 = vmul.f32 %v152, %v673
    %v685 = vmul.f32 %v147, %v677
    %v686 = vmul.f32 %v148, %v681
    %v687 = vlaneseq
    %v688 = vshrl.u32 %v687, 7
    %v689 = vsub.s32 1, %v688
    %v690 = vrot.slane %v653, %v689
    %v691 = vlaneseq
    %v692 = vshrl.u32 %v691, 7
    %v693 = vsub.s32 1, %v692
    %v694 = vrot.slane %v655, %v693
    %v695 = vlaneseq
    %v696 = vshrl.u32 %v695, 7
    %v697 = vsub.s32 1, %v696
    %v698 = vrot.slane %v657, %v697
    %v699 = vlaneseq
    %v700 = vshrl.u32 %v699, 7
    %v701 = vsub.s32 1, %v700
    %v702 = vrot.slane %v659, %v701
    %v703 = vlaneseq
    %v704 = vshrl.u32 %v703, 7
    %v705 = vsub.s32 1, %v704
    %v706 = vrot.slane %v661, %v705
    %v707 = vmul.f32 %v135, %v690
    %v708 = vmul.f32 %v136, %v694
    %v709 = vmul.f32 %v152, %v698
    %v710 = vmul.f32 %v147, %v702
    %v711 = vmul.f32 %v148, %v706
    %v712 = vld [vmem:[%s3] sm:$0xff]
    %v713 = vld [vmem:[%s3 + $0x8] sm:$0xff]
    %v714 = vld [vmem:[%s3 + $0x10] sm:$0xff]
    %v715 = vld [vmem:[%s3 + $0x18] sm:$0xff]
    %v716 = vld [vmem:[%s4] sm:$0xff]
    %v717 = vld [vmem:[%s4 + $0x8] sm:$0xff]
    %v718 = vld [vmem:[%s4 + $0x10] sm:$0xff]
    %v719 = vld [vmem:[%s4 + $0x18] sm:$0xff]
    %721 = vset.pattern.permute.xlu0 0
    %722 = vperm.xlu0 %721, %v716
    %v723 = vpop.permute.xlu0 %722
    %726 = vset.pattern.permute.xlu0 0
    %727 = vperm.xlu0 %726, %v717
    %v728 = vpop.permute.xlu0 %727
    %731 = vset.pattern.permute.xlu0 0
    %732 = vperm.xlu0 %731, %v718
    %v733 = vpop.permute.xlu0 %732
    %736 = vset.pattern.permute.xlu0 0
    %737 = vperm.xlu0 %736, %v719
    %v738 = vpop.permute.xlu0 %737
    %vm740 = vcmask 130048
    %v742 = vsel %vm740, %v712, 0
    %v745 = vsel %vm740, %v713, 0
    %v748 = vsel %vm740, %v714, 0
    %v751 = vsel %vm740, %v715, 0
    %753 = vmatprep.subr.mxu0 %v683
    %754 = vmatpush1.msra.mxu0 %v682
    %755 = vmatprep.subr.mxu0 %v708
    %756 = vmatpush1.msra.mxu0 %v707
    %757 = vmatprep.subr.mxu0 0.0
    %758 = vmatpush1.msra.mxu0 0.0
    %759 = vmatprep.subr.mxu0 0.0
    %760 = vmatpush1.msra.mxu0 0.0
    %761 = vmatprep.subr.mxu0 0.0
    %762 = vmatpush1.msra.mxu0 0.0
    %763 = vmatprep.subr.mxu0 0.0
    %764 = vmatpush1.msra.mxu0 0.0
    %765 = vmatprep.subr.mxu0 0.0
    %766 = vmatpush1.msra.mxu0 0.0
    %767 = vmatprep.subr.mxu0 0.0
    %768 = vmatpush1.msra.mxu0 0.0
    %769 = vmatprep.subr.mxu0 0.0
    %770 = vmatpush1.msra.mxu0 0.0
    %771 = vmatprep.subr.mxu0 0.0
    %772 = vmatpush1.msra.mxu0 0.0
    %773 = vmatprep.subr.mxu0 0.0
    %774 = vmatpush1.msra.mxu0 0.0
    %775 = vmatprep.subr.mxu0 0.0
    %776 = vmatpush1.msra.mxu0 0.0
    %777 = vmatprep.subr.mxu0 0.0
    %778 = vmatpush1.msra.mxu0 0.0
    %779 = vmatprep.subr.mxu0 0.0
    %780 = vmatpush1.msra.mxu0 0.0
    %781 = vmatprep.subr.mxu0 0.0
    %782 = vmatpush1.msra.mxu0 0.0
    %783 = vmatprep.subr.mxu0 0.0
    %784 = vmatpush1.msra.mxu0 0.0
    %785 = vmatprep.subr.mxu0 0.0
    %786 = vmatpush1.msra.mxu0 0.0
    %787 = vmatprep.subr.mxu0 0.0
    %788 = vmatpush1.msra.mxu0 0.0
    %789 = vmatprep.subr.mxu0 0.0
    %790 = vmatpush1.msra.mxu0 0.0
    %791 = vmatprep.subr.mxu0 0.0
    %792 = vmatpush1.msra.mxu0 0.0
    %793 = vmatprep.subr.mxu0 0.0
    %794 = vmatpush1.msra.mxu0 0.0
    %795 = vmatprep.subr.mxu0 0.0
    %796 = vmatpush1.msra.mxu0 0.0
    %797 = vmatprep.subr.mxu0 0.0
    %798 = vmatpush1.msra.mxu0 0.0
    %799 = vmatprep.subr.mxu0 0.0
    %800 = vmatpush1.msra.mxu0 0.0
    %801 = vmatprep.subr.mxu0 0.0
    %802 = vmatpush1.msra.mxu0 0.0
    %803 = vmatprep.subr.mxu0 0.0
    %804 = vmatpush1.msra.mxu0 0.0
    %805 = vmatprep.subr.mxu0 0.0
    %806 = vmatpush1.msra.mxu0 0.0
    %807 = vmatprep.subr.mxu0 0.0
    %808 = vmatpush1.msra.mxu0 0.0
    %809 = vmatprep.subr.mxu0 0.0
    %810 = vmatpush1.msra.mxu0 0.0
    %811 = vmatprep.subr.mxu0 0.0
    %812 = vmatpush1.msra.mxu0 0.0
    %813 = vmatprep.subr.mxu0 0.0
    %814 = vmatpush1.msra.mxu0 0.0
    %815 = vmatprep.subr.mxu0 0.0
    %816 = vmatpush1.msra.mxu0 0.0
    %817 = vmatprep.mubr.f32.mxu0 0.0
    %818 = vmatmul.mubr.f32.gmra.mrb[0].mxu0 %v742
    %v819 = vpop.f32.mrb[0].mxu0
    %v820 = vadd.f32 %v723, %v819
    %v821 = vpop.f32.mrb[0].mxu0
    %v822 = vadd.f32 %v723, %v821
    %823 = vmatprep.mubr.f32.mxu0 0.0
    %824 = vmatmul.mubr.f32.gmra.mrb[0].mxu0 %v745
    %v825 = vpop.f32.mrb[0].mxu0
    %v826 = vadd.f32 %v728, %v825
    %v827 = vpop.f32.mrb[0].mxu0
    %v828 = vadd.f32 %v728, %v827
    %829 = vmatprep.mubr.f32.mxu0 0.0
    %830 = vmatmul.mubr.f32.gmra.mrb[0].mxu0 %v748
    %v831 = vpop.f32.mrb[0].mxu0
    %v832 = vadd.f32 %v733, %v831
    %v833 = vpop.f32.mrb[0].mxu0
    %v834 = vadd.f32 %v733, %v833
    %835 = vmatprep.mubr.f32.mxu0 0.0
    %836 = vmatmul.mubr.f32.gmra.mrb[0].mxu0 %v751
    %v837 = vpop.f32.mrb[0].mxu0
    %v838 = vadd.f32 %v738, %v837
    %v839 = vpop.f32.mrb[0].mxu0
    %v840 = vadd.f32 %v738, %v839
    %841 = vdwg.mxu0
    %842 = vmatprep.subr.mxu0 %v685
    %843 = vmatpush1.msra.mxu0 %v684
    %844 = vmatprep.subr.mxu0 %v710
    %845 = vmatpush1.msra.mxu0 %v709
    %846 = vmatprep.subr.mxu0 0.0
    %847 = vmatpush1.msra.mxu0 0.0
    %848 = vmatprep.subr.mxu0 0.0
    %849 = vmatpush1.msra.mxu0 0.0
    %850 = vmatprep.subr.mxu0 0.0
    %851 = vmatpush1.msra.mxu0 0.0
    %852 = vmatprep.subr.mxu0 0.0
    %853 = vmatpush1.msra.mxu0 0.0
    %854 = vmatprep.subr.mxu0 0.0
    %855 = vmatpush1.msra.mxu0 0.0
    %856 = vmatprep.subr.mxu0 0.0
    %857 = vmatpush1.msra.mxu0 0.0
    %858 = vmatprep.subr.mxu0 0.0
    %859 = vmatpush1.msra.mxu0 0.0
    %860 = vmatprep.subr.mxu0 0.0
    %861 = vmatpush1.msra.mxu0 0.0
    %862 = vmatprep.subr.mxu0 0.0
    %863 = vmatpush1.msra.mxu0 0.0
    %864 = vmatprep.subr.mxu0 0.0
    %865 = vmatpush1.msra.mxu0 0.0
    %866 = vmatprep.subr.mxu0 0.0
    %867 = vmatpush1.msra.mxu0 0.0
    %868 = vmatprep.subr.mxu0 0.0
    %869 = vmatpush1.msra.mxu0 0.0
    %870 = vmatprep.subr.mxu0 0.0
    %871 = vmatpush1.msra.mxu0 0.0
    %872 = vmatprep.subr.mxu0 0.0
    %873 = vmatpush1.msra.mxu0 0.0
    %874 = vmatprep.subr.mxu0 0.0
    %875 = vmatpush1.msra.mxu0 0.0
    %876 = vmatprep.subr.mxu0 0.0
    %877 = vmatpush1.msra.mxu0 0.0
    %878 = vmatprep.subr.mxu0 0.0
    %879 = vmatpush1.msra.mxu0 0.0
    %880 = vmatprep.subr.mxu0 0.0
    %881 = vmatpush1.msra.mxu0 0.0
    %882 = vmatprep.subr.mxu0 0.0
    %883 = vmatpush1.msra.mxu0 0.0
    %884 = vmatprep.subr.mxu0 0.0
    %885 = vmatpush1.msra.mxu0 0.0
    %886 = vmatprep.subr.mxu0 0.0
    %887 = vmatpush1.msra.mxu0 0.0
    %888 = vmatprep.subr.mxu0 0.0
    %889 = vmatpush1.msra.mxu0 0.0
    %890 = vmatprep.subr.mxu0 0.0
    %891 = vmatpush1.msra.mxu0 0.0
    %892 = vmatprep.subr.mxu0 0.0
    %893 = vmatpush1.msra.mxu0 0.0
    %894 = vmatprep.subr.mxu0 0.0
    %895 = vmatpush1.msra.mxu0 0.0
    %896 = vmatprep.subr.mxu0 0.0
    %897 = vmatpush1.msra.mxu0 0.0
    %898 = vmatprep.subr.mxu0 0.0
    %899 = vmatpush1.msra.mxu0 0.0
    %900 = vmatprep.subr.mxu0 0.0
    %901 = vmatpush1.msra.mxu0 0.0
    %902 = vmatprep.subr.mxu0 0.0
    %903 = vmatpush1.msra.mxu0 0.0
    %904 = vmatprep.subr.mxu0 0.0
    %905 = vmatpush1.msra.mxu0 0.0
    %906 = vmatprep.mubr.f32.mxu0 0.0
    %907 = vmatmul.mubr.f32.gmra.mrb[0].mxu0 %v742
    %v908 = vpop.f32.mrb[0].mxu0
    %v909 = vadd.f32 %v723, %v908
    %v910 = vpop.f32.mrb[0].mxu0
    %v911 = vadd.f32 %v723, %v910
    %912 = vmatprep.mubr.f32.mxu0 0.0
    %913 = vmatmul.mubr.f32.gmra.mrb[0].mxu0 %v745
    %v914 = vpop.f32.mrb[0].mxu0
    %v915 = vadd.f32 %v728, %v914
    %v916 = vpop.f32.mrb[0].mxu0
    %v917 = vadd.f32 %v728, %v916
    %918 = vmatprep.mubr.f32.mxu0 0.0
    %919 = vmatmul.mubr.f32.gmra.mrb[0].mxu0 %v748
    %v920 = vpop.f32.mrb[0].mxu0
    %v921 = vadd.f32 %v733, %v920
    %v922 = vpop.f32.mrb[0].mxu0
    %v923 = vadd.f32 %v733, %v922
    %924 = vmatprep.mubr.f32.mxu0 0.0
    %925 = vmatmul.mubr.f32.gmra.mrb[0].mxu0 %v751
    %v926 = vpop.f32.mrb[0].mxu0
    %v927 = vadd.f32 %v738, %v926
    %v928 = vpop.f32.mrb[0].mxu0
    %v929 = vadd.f32 %v738, %v928
    %930 = vdwg.mxu0
    %931 = vmatprep.subr.mxu0 0.0
    %932 = vmatpush1.msra.mxu0 %v686
    %933 = vmatprep.subr.mxu0 0.0
    %934 = vmatpush1.msra.mxu0 %v711
    %935 = vmatprep.subr.mxu0 0.0
    %936 = vmatpush1.msra.mxu0 0.0
    %937 = vmatprep.subr.mxu0 0.0
    %938 = vmatpush1.msra.mxu0 0.0
    %939 = vmatprep.subr.mxu0 0.0
    %940 = vmatpush1.msra.mxu0 0.0
    %941 = vmatprep.subr.mxu0 0.0
    %942 = vmatpush1.msra.mxu0 0.0
    %943 = vmatprep.subr.mxu0 0.0
    %944 = vmatpush1.msra.mxu0 0.0
    %945 = vmatprep.subr.mxu0 0.0
    %946 = vmatpush1.msra.mxu0 0.0
    %947 = vmatprep.subr.mxu0 0.0
    %948 = vmatpush1.msra.mxu0 0.0
    %949 = vmatprep.subr.mxu0 0.0
    %950 = vmatpush1.msra.mxu0 0.0
    %951 = vmatprep.subr.mxu0 0.0
    %952 = vmatpush1.msra.mxu0 0.0
    %953 = vmatprep.subr.mxu0 0.0
    %954 = vmatpush1.msra.mxu0 0.0
    %955 = vmatprep.subr.mxu0 0.0
    %956 = vmatpush1.msra.mxu0 0.0
    %957 = vmatprep.subr.mxu0 0.0
    %958 = vmatpush1.msra.mxu0 0.0
    %959 = vmatprep.subr.mxu0 0.0
    %960 = vmatpush1.msra.mxu0 0.0
    %961 = vmatprep.subr.mxu0 0.0
    %962 = vmatpush1.msra.mxu0 0.0
    %963 = vmatprep.subr.mxu0 0.0
    %964 = vmatpush1.msra.mxu0 0.0
    %965 = vmatprep.subr.mxu0 0.0
    %966 = vmatpush1.msra.mxu0 0.0
    %967 = vmatprep.subr.mxu0 0.0
    %968 = vmatpush1.msra.mxu0 0.0
    %969 = vmatprep.subr.mxu0 0.0
    %970 = vmatpush1.msra.mxu0 0.0
    %971 = vmatprep.subr.mxu0 0.0
    %972 = vmatpush1.msra.mxu0 0.0
    %973 = vmatprep.subr.mxu0 0.0
    %974 = vmatpush1.msra.mxu0 0.0
    %975 = vmatprep.subr.mxu0 0.0
    %976 = vmatpush1.msra.mxu0 0.0
    %977 = vmatprep.subr.mxu0 0.0
    %978 = vmatpush1.msra.mxu0 0.0
    %979 = vmatprep.subr.mxu0 0.0
    %980 = vmatpush1.msra.mxu0 0.0
    %981 = vmatprep.subr.mxu0 0.0
    %982 = vmatpush1.msra.mxu0 0.0
    %983 = vmatprep.subr.mxu0 0.0
    %984 = vmatpush1.msra.mxu0 0.0
    %985 = vmatprep.subr.mxu0 0.0
    %986 = vmatpush1.msra.mxu0 0.0
    %987 = vmatprep.subr.mxu0 0.0
    %988 = vmatpush1.msra.mxu0 0.0
    %989 = vmatprep.subr.mxu0 0.0
    %990 = vmatpush1.msra.mxu0 0.0
    %991 = vmatprep.subr.mxu0 0.0
    %992 = vmatpush1.msra.mxu0 0.0
    %993 = vmatprep.subr.mxu0 0.0
    %994 = vmatpush1.msra.mxu0 0.0
    %995 = vmatprep.mubr.f32.mxu0 0.0
    %996 = vmatmul.mubr.f32.gmra.mrb[0].mxu0 %v742
    %v997 = vpop.f32.mrb[0].mxu0
    %v998 = vadd.f32 %v723, %v997
    %v999 = vpop.f32.mrb[0].mxu0
    %1000 = vmatprep.mubr.f32.mxu0 0.0
    %1001 = vmatmul.mubr.f32.gmra.mrb[0].mxu0 %v745
    %v1002 = vpop.f32.mrb[0].mxu0
    %v1003 = vadd.f32 %v728, %v1002
    %v1004 = vpop.f32.mrb[0].mxu0
    %1005 = vmatprep.mubr.f32.mxu0 0.0
    %1006 = vmatmul.mubr.f32.gmra.mrb[0].mxu0 %v748
    %v1007 = vpop.f32.mrb[0].mxu0
    %v1008 = vadd.f32 %v733, %v1007
    %v1009 = vpop.f32.mrb[0].mxu0
    %1010 = vmatprep.mubr.f32.mxu0 0.0
    %1011 = vmatmul.mubr.f32.gmra.mrb[0].mxu0 %v751
    %v1012 = vpop.f32.mrb[0].mxu0
    %v1013 = vadd.f32 %v738, %v1012
    %v1014 = vpop.f32.mrb[0].mxu0
    %1015 = vdwg.mxu0
    %v1016 = vmax.f32 %v820, 1e-06
    %v1017 = vmax.f32 %v822, 1e-06
    %v1018 = vmax.f32 %v909, 1e-06
    %v1019 = vmax.f32 %v911, 1e-06
    %v1020 = vmax.f32 %v998, 1e-06
    %v1021 = vmax.f32 %v826, 1e-06
    %v1022 = vmax.f32 %v828, 1e-06
    %v1023 = vmax.f32 %v915, 1e-06
    %v1024 = vmax.f32 %v917, 1e-06
    %v1025 = vmax.f32 %v1003, 1e-06
    %v1026 = vmax.f32 %v832, 1e-06
    %v1027 = vmax.f32 %v834, 1e-06
    %v1028 = vmax.f32 %v921, 1e-06
    %v1029 = vmax.f32 %v923, 1e-06
    %v1030 = vmax.f32 %v1008, 1e-06
    %v1031 = vmax.f32 %v838, 1e-06
    %v1032 = vmax.f32 %v840, 1e-06
    %v1033 = vmax.f32 %v927, 1e-06
    %v1034 = vmax.f32 %v929, 1e-06
    %v1035 = vmax.f32 %v1013, 1e-06
    %v1036 = vmul.f32 %v1016, %v1016
    %v1037 = vmul.f32 %v1017, %v1017
    %v1038 = vmul.f32 %v1018, %v1018
    %v1039 = vmul.f32 %v1019, %v1019
    %v1040 = vmul.f32 %v1020, %v1020
    %v1041 = vmul.f32 %v1021, %v1021
    %v1042 = vmul.f32 %v1022, %v1022
    %v1043 = vmul.f32 %v1023, %v1023
    %v1044 = vmul.f32 %v1024, %v1024
    %v1045 = vmul.f32 %v1025, %v1025
    %v1046 = vmul.f32 %v1026, %v1026
    %v1047 = vmul.f32 %v1027, %v1027
    %v1048 = vmul.f32 %v1028, %v1028
    %v1049 = vmul.f32 %v1029, %v1029
    %v1050 = vmul.f32 %v1030, %v1030
    %v1051 = vmul.f32 %v1031, %v1031
    %v1052 = vmul.f32 %v1032, %v1032
    %v1053 = vmul.f32 %v1033, %v1033
    %v1054 = vmul.f32 %v1034, %v1034
    %v1055 = vmul.f32 %v1035, %v1035
    %v1056 = vmul.f32 %v1036, %v1016
    %v1057 = vmul.f32 %v1037, %v1017
    %v1058 = vmul.f32 %v1038, %v1018
    %v1059 = vmul.f32 %v1039, %v1019
    %v1060 = vmul.f32 %v1040, %v1020
    %v1061 = vmul.f32 %v1041, %v1021
    %v1062 = vmul.f32 %v1042, %v1022
    %v1063 = vmul.f32 %v1043, %v1023
    %v1064 = vmul.f32 %v1044, %v1024
    %v1065 = vmul.f32 %v1045, %v1025
    %v1066 = vmul.f32 %v1046, %v1026
    %v1067 = vmul.f32 %v1047, %v1027
    %v1068 = vmul.f32 %v1048, %v1028
    %v1069 = vmul.f32 %v1049, %v1029
    %v1070 = vmul.f32 %v1050, %v1030
    %v1071 = vmul.f32 %v1051, %v1031
    %v1072 = vmul.f32 %v1052, %v1032
    %v1073 = vmul.f32 %v1053, %v1033
    %v1074 = vmul.f32 %v1054, %v1034
    %v1075 = vmul.f32 %v1055, %v1035
    %v1076 = vcombine.low %v476, %v477
    %1078 = vst [vmem:[%s6] sm:$0x77] %v1076
    %vm1079 = vcmask 256000
    %1080 = vst.msk [vmem:[%s6 + $0x8] sm:$0x7] %vm1079, %v478
    %v1084 = vcombine.low %v653, %v655
    %v1086 = vunpack.c.l.s4 1983009808
    %v1087 = vunpack.c.0.s8 %v1086
    %v1088 = vlaneseq
    %v1089 = vshrl.u32 %v1088, 7
    %v1090 = vsub.s32 %v1087, %v1089
    %v1091 = vrot.slane %v1084, %v1090
    %v1093 = vunpack.c.l.s4 1983009808
    %v1094 = vunpack.c.0.s8 %v1093
    %v1095 = vlaneseq
    %v1096 = vshrl.u32 %v1095, 7
    %v1097 = vsub.s32 %v1094, %v1096
    %v1098 = vrot.slane %v657, %v1097
    %v1099 = vcombine.low %v1091, %v1098
    %vm1101 = vcmask 1041408
    %vm1102 = vcmask 1043458
    %vm1103 = vmor %vm1102, %vm1101
    %vm1104 = vcmask 259076
    %vm1105 = vmor %vm1104, %vm1103
    %1106 = vst.msk [vmem:[#allocation2] sm:$0x3f] %vm1105, %v1099
    %v1107 = vld [vmem:[%s5] sm:$0x7]
    %v1109 = vlaneseq
    %v1110 = vshrl.u32 %v1109, 7
    %v1111 = vsub.s32 0, %v1110
    %v1112 = vrot.slane %v1107, %v1111
    %v1113 = vlaneseq
    %v1114 = vshrl.u32 %v1113, 7
    %v1115 = vsub.s32 1, %v1114
    %v1116 = vrot.slane %v1107, %v1115
    %v1117 = vlaneseq
    %v1118 = vshrl.u32 %v1117, 7
    %v1119 = vsub.s32 2, %v1118
    %v1120 = vrot.slane %v1107, %v1119
    %v1124 = vmul.f32 %v1056, %v1112
    %v1125 = vmul.f32 %v1057, %v1116
    %v1126 = vmul.f32 %v1058, %v1120
    %v1127 = vmul.f32 %v1061, %v1112
    %v1128 = vmul.f32 %v1062, %v1116
    %v1129 = vmul.f32 %v1063, %v1120
    %v1130 = vmul.f32 %v1066, %v1112
    %v1131 = vmul.f32 %v1067, %v1116
    %v1132 = vmul.f32 %v1068, %v1120
    %v1133 = vmul.f32 %v1071, %v1112
    %v1134 = vmul.f32 %v1072, %v1116
    %v1135 = vmul.f32 %v1073, %v1120
    %v1136 = vadd.f32 %v1124, %v1125
    %v1137 = vsel %vm43, %v1126, 0.0
    %v1138 = vadd.f32 %v1136, %v1137
    %1139 = vadd.xlane.f32.xlu0 %v1138
    %v1140 = vpop.xlane.xlu0 %1139
    %v1141 = vadd.f32 %v1127, %v1128
    %v1142 = vsel %vm43, %v1129, 0.0
    %v1143 = vadd.f32 %v1141, %v1142
    %1144 = vadd.xlane.f32.xlu0 %v1143
    %v1145 = vpop.xlane.xlu0 %1144
    %v1146 = vadd.f32 %v1130, %v1131
    %v1147 = vsel %vm43, %v1132, 0.0
    %v1148 = vadd.f32 %v1146, %v1147
    %1149 = vadd.xlane.f32.xlu0 %v1148
    %v1150 = vpop.xlane.xlu0 %1149
    %v1151 = vadd.f32 %v1133, %v1134
    %v1152 = vsel %vm43, %v1135, 0.0
    %v1153 = vadd.f32 %v1151, %v1152
    %1154 = vadd.xlane.f32.xlu0 %v1153
    %v1155 = vpop.xlane.xlu0 %1154
    %v1156 = vmul.f32 %v1140, 0.00390625
    %v1157 = vmul.f32 %v1145, 0.00390625
    %v1158 = vmul.f32 %v1150, 0.00390625
    %v1159 = vmul.f32 %v1155, 0.00390625
    %v1160 = vlog2.pop %v1156
    %v1161 = vmul.f32 %v1160, 0.6931472
    %v1162 = vlog2.pop %v1157
    %v1163 = vmul.f32 %v1162, 0.6931472
    %v1164 = vlog2.pop %v1158
    %v1165 = vmul.f32 %v1164, 0.6931472
    %v1166 = vlog2.pop %v1159
    %v1167 = vmul.f32 %v1166, 0.6931472
    %v1168 = vmul.f32 %v1161, 0.33333334
    %v1169 = vmul.f32 %v1163, 0.33333334
    %v1170 = vmul.f32 %v1165, 0.33333334
    %v1171 = vmul.f32 %v1167, 0.33333334
    %v1172 = vmul.f32 %v1168, 1.442695
    %v1173 = vpow.pop %v1172
    %v1174 = vmul.f32 %v1169, 1.442695
    %v1175 = vpow.pop %v1174
    %v1176 = vmul.f32 %v1170, 1.442695
    %v1177 = vpow.pop %v1176
    %v1178 = vmul.f32 %v1171, 1.442695
    %v1179 = vpow.pop %v1178
    %vm1180 = vcmask 7168
    %1181 = vst.msk [vmem:[%s8] sm:$0xff] %vm1180, %v1173
    %1182 = vst.msk [vmem:[%s8 + $0x8] sm:$0xff] %vm1180, %v1175
    %1183 = vst.msk [vmem:[%s8 + $0x10] sm:$0xff] %vm1180, %v1177
    %1184 = vst.msk [vmem:[%s8 + $0x18] sm:$0xff] %vm1180, %v1179
    %v1185 = vcombine.low %v478, %v479
    %1186 = vrot.lane.b32.xlu0 %v1185, 96
    %v1187 = vpop.permute.xlu0 %1186
    %1188 = vrot.lane.b32.xlu0 %v480, 96
    %v1189 = vpop.permute.xlu0 %1188
    %v1190 = vrot.slane %v1187, 4
    %v1191 = vrot.slane %v1189, 4
    %vm1192 = vcmask 1043456
    %v1193 = vsel %vm1192, %v1190, %v1191
    %vm1194 = vcmask 785408
    %v1195 = vsel %vm1194, %v1187, %v1193
    %s1198 = scalar_lea.vmem %s6, 12
    %1199 = vst [vmem:[%s1198] sm:$0x77] %v1195
    %1200 = vst.msk [vmem:[%s1198 + $0x8] sm:$0x7] %vm1079, %v1189
    %v1203 = vcombine.low %v657, %v659
    %v1205 = vunpack.c.l.s4 1983009808
    %v1206 = vunpack.c.0.s8 %v1205
    %v1207 = vlaneseq
    %v1208 = vshrl.u32 %v1207, 7
    %v1209 = vsub.s32 %v1206, %v1208
    %v1210 = vrot.slane %v1203, %v1209
    %v1212 = vunpack.c.l.s4 1983009808
    %v1213 = vunpack.c.0.s8 %v1212
    %v1214 = vlaneseq
    %v1215 = vshrl.u32 %v1214, 7
    %v1216 = vsub.s32 %v1213, %v1215
    %v1217 = vrot.slane %v661, %v1216
    %v1218 = vcombine.low %v1210, %v1217
    %1219 = vrot.lane.b32.xlu0 %v1218, 96
    %v1220 = vpop.permute.xlu0 %1219
    %v1221 = vrot.slane %v1220, 2
    %v1222 = vsel %vm1194, %v1220, %v1221
    %s1224 = scalar_lea.vmem [#allocation2], 6
    %1225 = vst.msk [vmem:[%s1224] sm:$0x3f] %vm1105, %v1222
    %v1226 = vld [vmem:[%s5] sm:$0x7]
    %v1228 = vlaneseq
    %v1229 = vshrl.u32 %v1228, 7
    %v1230 = vsub.s32 0, %v1229
    %v1231 = vrot.slane %v1226, %v1230
    %v1232 = vlaneseq
    %v1233 = vshrl.u32 %v1232, 7
    %v1234 = vsub.s32 1, %v1233
    %v1235 = vrot.slane %v1226, %v1234
    %v1236 = vlaneseq
    %v1237 = vshrl.u32 %v1236, 7
    %v1238 = vsub.s32 2, %v1237
    %v1239 = vrot.slane %v1226, %v1238
    %1240 = vrot.lane.b32.xlu0 %v1231, 32
    %v1241 = vpop.permute.xlu0 %1240
    %1242 = vrot.lane.b32.xlu0 %v1235, 32
    %v1243 = vpop.permute.xlu0 %1242
    %1244 = vrot.lane.b32.xlu0 %v1239, 32
    %v1245 = vpop.permute.xlu0 %1244
    %v1246 = vsel %vm43, %v1241, %v1243
    %v1247 = vsel %vm43, %v1243, %v1245
    %v1251 = vmul.f32 %v1058, %v1241
    %v1252 = vmul.f32 %v1059, %v1246
    %v1253 = vmul.f32 %v1060, %v1247
    %v1254 = vmul.f32 %v1063, %v1241
    %v1255 = vmul.f32 %v1064, %v1246
    %v1256 = vmul.f32 %v1065, %v1247
    %v1257 = vmul.f32 %v1068, %v1241
    %v1258 = vmul.f32 %v1069, %v1246
    %v1259 = vmul.f32 %v1070, %v1247
    %v1260 = vmul.f32 %v1073, %v1241
    %v1261 = vmul.f32 %v1074, %v1246
    %v1262 = vmul.f32 %v1075, %v1247
    %1275 = vrot.lane.b32.xlu0 %v1251, 96
    %v1276 = vpop.permute.xlu0 %1275
    %1277 = vrot.lane.b32.xlu0 %v1252, 96
    %v1278 = vpop.permute.xlu0 %1277
    %1279 = vrot.lane.b32.xlu0 %v1253, 96
    %v1280 = vpop.permute.xlu0 %1279
    %1281 = vrot.lane.b32.xlu0 %v1254, 96
    %v1282 = vpop.permute.xlu0 %1281
    %1283 = vrot.lane.b32.xlu0 %v1255, 96
    %v1284 = vpop.permute.xlu0 %1283
    %1285 = vrot.lane.b32.xlu0 %v1256, 96
    %v1286 = vpop.permute.xlu0 %1285
    %1287 = vrot.lane.b32.xlu0 %v1257, 96
    %v1288 = vpop.permute.xlu0 %1287
    %1289 = vrot.lane.b32.xlu0 %v1258, 96
    %v1290 = vpop.permute.xlu0 %1289
    %1291 = vrot.lane.b32.xlu0 %v1259, 96
    %v1292 = vpop.permute.xlu0 %1291
    %1293 = vrot.lane.b32.xlu0 %v1260, 96
    %v1294 = vpop.permute.xlu0 %1293
    %1295 = vrot.lane.b32.xlu0 %v1261, 96
    %v1296 = vpop.permute.xlu0 %1295
    %1297 = vrot.lane.b32.xlu0 %v1262, 96
    %v1298 = vpop.permute.xlu0 %1297
    %v1299 = vsel %vm1194, %v1276, %v1278
    %v1300 = vsel %vm1194, %v1278, %v1280
    %v1301 = vsel %vm1194, %v1282, %v1284
    %v1302 = vsel %vm1194, %v1284, %v1286
    %v1303 = vsel %vm1194, %v1288, %v1290
    %v1304 = vsel %vm1194, %v1290, %v1292
    %v1305 = vsel %vm1194, %v1294, %v1296
    %v1306 = vsel %vm1194, %v1296, %v1298
    %v1319 = vadd.f32 %v1299, %v1300
    %v1320 = vsel %vm43, %v1280, 0.0
    %v1321 = vadd.f32 %v1319, %v1320
    %1322 = vadd.xlane.f32.xlu0 %v1321
    %v1323 = vpop.xlane.xlu0 %1322
    %v1324 = vadd.f32 %v1301, %v1302
    %v1325 = vsel %vm43, %v1286, 0.0
    %v1326 = vadd.f32 %v1324, %v1325
    %1327 = vadd.xlane.f32.xlu0 %v1326
    %v1328 = vpop.xlane.xlu0 %1327
    %v1329 = vadd.f32 %v1303, %v1304
    %v1330 = vsel %vm43, %v1292, 0.0
    %v1331 = vadd.f32 %v1329, %v1330
    %1332 = vadd.xlane.f32.xlu0 %v1331
    %v1333 = vpop.xlane.xlu0 %1332
    %v1334 = vadd.f32 %v1305, %v1306
    %v1335 = vsel %vm43, %v1298, 0.0
    %v1336 = vadd.f32 %v1334, %v1335
    %1337 = vadd.xlane.f32.xlu0 %v1336
    %v1338 = vpop.xlane.xlu0 %1337
    %v1339 = vmul.f32 %v1323, 0.00390625
    %v1340 = vmul.f32 %v1328, 0.00390625
    %v1341 = vmul.f32 %v1333, 0.00390625
    %v1342 = vmul.f32 %v1338, 0.00390625
    %v1343 = vlog2.pop %v1339
    %v1344 = vmul.f32 %v1343, 0.6931472
    %v1345 = vlog2.pop %v1340
    %v1346 = vmul.f32 %v1345, 0.6931472
    %v1347 = vlog2.pop %v1341
    %v1348 = vmul.f32 %v1347, 0.6931472
    %v1349 = vlog2.pop %v1342
    %v1350 = vmul.f32 %v1349, 0.6931472
    %v1351 = vmul.f32 %v1344, 0.33333334
    %v1352 = vmul.f32 %v1346, 0.33333334
    %v1353 = vmul.f32 %v1348, 0.33333334
    %v1354 = vmul.f32 %v1350, 0.33333334
    %v1355 = vmul.f32 %v1351, 1.442695
    %v1356 = vpow.pop %v1355
    %v1357 = vmul.f32 %v1352, 1.442695
    %v1358 = vpow.pop %v1357
    %v1359 = vmul.f32 %v1353, 1.442695
    %v1360 = vpow.pop %v1359
    %v1361 = vmul.f32 %v1354, 1.442695
    %v1362 = vpow.pop %v1361
    %s1363 = scalar_lea.vmem %s8, 32
    %1364 = vst.msk [vmem:[%s1363] sm:$0xff] %vm1180, %v1356
    %1365 = vst.msk [vmem:[%s1363 + $0x8] sm:$0xff] %vm1180, %v1358
    %1366 = vst.msk [vmem:[%s1363 + $0x10] sm:$0xff] %vm1180, %v1360
    %1367 = vst.msk [vmem:[%s1363 + $0x18] sm:$0xff] %vm1180, %v1362
    // Predicated region
    $region26: #{tpu_custom_call.1} parent=1 // pred_check
      _
    $region27: #{tpu_custom_call.1} parent=1 // pred_check_branch
      %1369 = sbr.rel (0) target = $region29
    $region28: #{tpu_custom_call.1} parent=1 // pred_region
      _
    $region29: #{tpu_custom_call.1} parent=1 // pred_fallthru
      _
    // Predicated region
    $region30: #{tpu_custom_call.1} parent=1 // pred_check
      _
    $region31: #{tpu_custom_call.1} parent=1 // pred_check_branch
      %1371 = sbr.rel (0) target = $region33
    $region32: #{tpu_custom_call.1} parent=1 // pred_region
      %s1373 = ssub.s32 192, 192
      %1374 = vsyncadd [#allocation3], %s1373
      %s1375 = sshll.u32 [#allocation2], 4
      %s1376 = int_to_ptr.vmem [resolvable:$true] %s1375
      %1381 = dma.vmem_to_hbm [thread:$0]  %s1376, 192, %s7, [#allocation3], 96, 96, 6
    $region33: #{tpu_custom_call.1} parent=1 // pred_fallthru
      _
    // Predicated region
    $region34: #{tpu_custom_call.1} parent=1 // pred_check
      _
    $region35: #{tpu_custom_call.1} parent=1 // pred_check_branch
      %1383 = sbr.rel (0) target = $region37
    $region36: #{tpu_custom_call.1} parent=1 // pred_region
      _
    $region37: #{tpu_custom_call.1} parent=1 // pred_fallthru
      _
    // Predicated region
    $region38: #{tpu_custom_call.1} parent=1 // pred_check
      _
    $region39: #{tpu_custom_call.1} parent=1 // pred_check_branch
      %1385 = sbr.rel (0) target = $region41
    $region40: #{tpu_custom_call.1} parent=1 // pred_region
      _
    $region41: #{tpu_custom_call.1} parent=1 // pred_fallthru
      _
    // Predicated region
    $region42: #{tpu_custom_call.1} parent=1 // pred_check
      _
    $region43: #{tpu_custom_call.1} parent=1 // pred_check_branch
      %1387 = sbr.rel (0) target = $region45
    $region44: #{tpu_custom_call.1} parent=1 // pred_region
      %1388 = dma.done [#allocation3], 192
    $region45: #{tpu_custom_call.1} parent=1 // pred_fallthru
      _
    // Predicated region
    $region46: #{tpu_custom_call.1} parent=1 // pred_check
      _
    $region47: #{tpu_custom_call.1} parent=1 // pred_check_branch
      %1390 = sbr.rel (0) target = $region49
    $region48: #{tpu_custom_call.1} parent=1 // pred_region
      _
    $region49: #{tpu_custom_call.1} parent=1 // pred_fallthru
      _
    %1391 = vsyncpa [#allocation3], 1

</llo_original>
